<compile_context>
chip_gen: v5e
topology: v5e:2x2
jax: 0.10.0
libtpu: 0.0.40
codegen_flags: <defaults>
</compile_context>

<pallas_src>
import math

import numpy as np
import jax
import jax.numpy as jnp
from jax.experimental import pallas as pl
from jax.experimental.pallas import tpu as pltpu


def _pair(v):
    return tuple(v) if isinstance(v, (tuple, list)) else (v, v)


def _cdiv(a, b):
    return -(-a // b)


# ----------------------------- Pallas kernel --------------------------------

def _make_kernel(phase_taps, Lout, Cin2, Cout2):
    """phase_taps: per output phase, list of static (flat_offset, tap_index)."""

    def kernel(w_ref, b_ref, x_ref, o_ref):
        # w_ref: VMEM (kH*kW, 2Cout, 2Cin) f32  complex block weights
        # b_ref: VMEM (2Cout, 1) f32            bias column (zeros if absent)
        # x_ref: VMEM (1, 2Cin, Lin) f32        one flattened input stripe
        # o_ref: VMEM (1, P*2Cout, Lout) f32    all phases of this stripe
        bias = b_ref[...]                                    # (2Cout, 1)
        for p, taps in enumerate(phase_taps):
            if not taps:
                # phase receives no kernel taps (e.g. gcd(dilation, stride) > 1)
                o_ref[0, p * Cout2:(p + 1) * Cout2, :] = jnp.broadcast_to(
                    bias, (Cout2, Lout))
                continue
            acc = None
            for (off, kidx) in taps:
                for c in range(Cin2):
                    # (1, Lout) lane-dense input row  x  (2Cout, 1) weight col
                    term = (x_ref[0, c:c + 1, off:off + Lout]
                            * w_ref[kidx, :, c:c + 1])
                    acc = term if acc is None else acc + term
            o_ref[0, p * Cout2:(p + 1) * Cout2, :] = acc + bias

    return kernel


# ------------------------------ wrapper --------------------------------------

def complex_conv_transpose2d(x, w_r, w_i, bias, *, stride=1, padding=0,
                             output_padding=0, dilation=1,
                             row_tile=8, lane_target=128):
    """x: (N, Cin, H, W, 2) f32;  w_r/w_i: (Cin, Cout, kH, kW);  bias: (Cout, 2) or None."""
    sh, sw = _pair(stride)
    ph, pw = _pair(padding)
    oph, opw = _pair(output_padding)
    dil_h, dil_w = _pair(dilation)

    N, Cin, H, W, two = x.shape
    assert two == 2
    _, Cout, kH, kW = w_r.shape
    Cin2, Cout2 = 2 * Cin, 2 * Cout

    Hout = (H - 1) * sh - 2 * ph + dil_h * (kH - 1) + oph + 1
    Wout = (W - 1) * sw - 2 * pw + dil_w * (kW - 1) + opw + 1
    Hq = _cdiv(Hout, sh)          # rows per output phase
    Wq = _cdiv(Wout, sw)          # cols per output phase
    P = sh * sw

    # -------- static polyphase tap tables (trace-time Python) ---------------
    # Gather form: out[oh, ow] += x[ih, iw] @ Wblk[kh, kw] with
    # oh = ih*sh + kh*dil_h - ph.  For phase rh = oh % sh the tap kh
    # contributes iff (kh*dil_h - ph - rh) % sh == 0, then ih = oh//sh - d_h.
    taps_h = [[(kh, (kh * dil_h - ph - rh) // sh) for kh in range(kH)
               if (kh * dil_h - ph - rh) % sh == 0] for rh in range(sh)]
    taps_w = [[(kw, (kw * dil_w - pw - rw) // sw) for kw in range(kW)
               if (kw * dil_w - pw - rw) % sw == 0] for rw in range(sw)]

    dh_all = [d for lst in taps_h for (_, d) in lst] or [0]
    dw_all = [d for lst in taps_w for (_, d) in lst] or [0]
    dh_max, dh_min = max(dh_all), min(dh_all)
    dw_max, dw_min = max(dw_all), min(dw_all)

    # -------- tiling geometry ------------------------------------------------
    Tq = max(8, ((row_tile + 7) // 8) * 8)      # phase rows per band (sublane aligned)
    n_bands = _cdiv(Hq, Tq)
    Hq_pad = n_bands * Tq

    pad_top = max(0, dh_max)
    pad_bottom = max(0, Hq_pad - dh_min + 1 - H)   # +1 row for flat-offset overhang
    pad_left = max(0, dw_max)
    pad_right = max(0, Wq - dw_min - W)
    Wpad = W + pad_left + pad_right
    band_rows = Tq + (dh_max - dh_min) + 1         # band + row halo + overhang row

    # segments = (batch, row-band); stripes pack S segments along the lane axis
    n_segs = N * n_bands
    S = min(n_segs, max(1, _cdiv(lane_target, Wpad)))
    n_stripes = _cdiv(n_segs, S)
    if n_stripes == 1 and n_segs >= 2 and S * Wpad < 2 * lane_target:
        # not enough material for full lanes on two cores: prefer 2 grid steps
        # so both v7x TensorCores are fed at tiny batch sizes.
        S = _cdiv(n_segs, 2)
        n_stripes = _cdiv(n_segs, S)
    n_segs_pad = n_stripes * S

    Wstripe = S * Wpad                 # lane pitch of one segment row (in == out)
    Lin = band_rows * Wstripe          # flattened (rows x width) input length
    Lout = Tq * Wstripe                # flattened (rows x width) output length

    # per-phase tap list with static flat offsets into the flattened stripe
    phase_taps = []
    for rh in range(sh):
        for rw in range(sw):
            taps = []
            for (kh, d_h) in taps_h[rh]:
                for (kw, d_w) in taps_w[rw]:
                    dr = dh_max - d_h          # row offset inside the band window
                    dc = pad_left - d_w        # col offset inside a segment
                    taps.append((dr * Wstripe + dc, kh * kW + kw))
            phase_taps.append(taps)

    # -------- wrapper layout: pack complex, pad, cut halo'd bands, stripes ----
    x_pack = jnp.concatenate([x[..., 0], x[..., 1]], axis=1).astype(jnp.float32)
    x_padded = jnp.pad(x_pack, ((0, 0), (0, 0),
                                (pad_top, pad_bottom), (pad_left, pad_right)))
    row_starts = [b * Tq - dh_max + pad_top for b in range(n_bands)]
    segs = jnp.stack([x_padded[:, :, rs:rs + band_rows, :] for rs in row_starts],
                     axis=1)                                # (N, n_bands, Cin2, rows, Wpad)
    segs = segs.reshape(n_segs, Cin2, band_rows, Wpad)
    if n_segs_pad > n_segs:
        segs = jnp.pad(segs, ((0, n_segs_pad - n_segs), (0, 0), (0, 0), (0, 0)))
    x_stripes = segs.reshape(n_stripes, S, Cin2, band_rows, Wpad)
    x_stripes = jnp.transpose(x_stripes, (0, 2, 3, 1, 4))   # (stripe, Cin2, rows, S, Wpad)
    x_stripes = x_stripes.reshape(n_stripes, Cin2, Lin)

    # complex block weights (gather form of conv_transpose: no spatial flip).
    # w_blk[t, o, c]:  real-out rows = [ w_r | -w_i ],  imag-out rows = [ w_i | w_r ]
    wr = jnp.transpose(w_r, (2, 3, 0, 1)).reshape(kH * kW, Cin, Cout)
    wi = jnp.transpose(w_i, (2, 3, 0, 1)).reshape(kH * kW, Cin, Cout)
    w_in_out = jnp.concatenate([jnp.concatenate([wr, wi], axis=2),
                                jnp.concatenate([-wi, wr], axis=2)], axis=1)
    w_blk = jnp.transpose(w_in_out, (0, 2, 1)).astype(jnp.float32)  # (kHkW, Cout2, Cin2)

    if bias is None:
        b_col = jnp.zeros((Cout2, 1), jnp.float32)
    else:
        b_col = jnp.concatenate([bias[:, 0], bias[:, 1]]).astype(jnp.float32)
        b_col = b_col.reshape(Cout2, 1)

    kernel = _make_kernel(phase_taps, Lout, Cin2, Cout2)

    out = pl.pallas_call(
        kernel,
        out_shape=jax.ShapeDtypeStruct((n_stripes, P * Cout2, Lout), jnp.float32),
        grid=(n_stripes,),
        in_specs=[
            pl.BlockSpec((kH * kW, Cout2, Cin2), lambda s: (0, 0, 0)),   # weights (VMEM)
            pl.BlockSpec((Cout2, 1), lambda s: (0, 0)),                  # bias    (VMEM)
            pl.BlockSpec((1, Cin2, Lin), lambda s: (s, 0, 0)),           # input stripe
        ],
        out_specs=pl.BlockSpec((1, P * Cout2, Lout), lambda s: (s, 0, 0)),
        compiler_params=pltpu.CompilerParams(
            dimension_semantics=("parallel",)),
    )(w_blk, b_col, x_stripes)

    # -------- reassemble phases + segments into (N, 2Cout, Hout, Wout) --------
    # kernel layout: [stripe, (rh, rw, o), (q, s, j_padded)]
    out = out.reshape(n_stripes, sh, sw, Cout2, Tq, S, Wpad)[..., :Wq]
    out = jnp.transpose(out, (0, 5, 3, 4, 1, 6, 2))      # (stripe, s, o, q, rh, j, rw)
    out = out.reshape(n_segs_pad, Cout2, Tq * sh, Wq * sw)[:n_segs]
    out = out.reshape(N, n_bands, Cout2, Tq * sh, Wq * sw)
    out = jnp.transpose(out, (0, 2, 1, 3, 4)).reshape(N, Cout2, Hq_pad * sh, Wq * sw)
    out = out[:, :, :Hout, :Wout]

    # back to PyTorch layout (N, Cout, Hout, Wout, 2)
    return jnp.stack([out[:, :Cout], out[:, Cout:]], axis=-1)


# ------------------------- numpy reference (for checking) --------------------

def _ref_conv_transpose2d(x, w, stride, padding, output_padding, dilation):
    N, Cin, H, W = x.shape
    _, Cout, kH, kW = w.shape
    sh, sw = stride; ph, pw = padding; oph, opw = output_padding; dh, dw = dilation
    Hout = (H - 1) * sh - 2 * ph + dh * (kH - 1) + oph + 1
    Wout = (W - 1) * sw - 2 * pw + dw * (kW - 1) + opw + 1
    out = np.zeros((N, Cout, Hout, Wout), np.float64)
    for n in range(N):
        for ci in range(Cin):
            for ih in range(H):
                for iw in range(W):
                    v = x[n, ci, ih, iw]
                    for kh in range(kH):
                        oh = ih * sh + kh * dh - ph
                        if not (0 <= oh < Hout):
                            continue
                        for kw in range(kW):
                            ow = iw * sw + kw * dw - pw
                            if not (0 <= ow < Wout):
                                continue
                            out[n, :, oh, ow] += v * w[ci, :, kh, kw]
    return out


def _ref_forward(x, w_r, w_i, bias, stride, padding, output_padding, dilation):
    x_r = np.asarray(x[..., 0], np.float64)
    x_i = np.asarray(x[..., 1], np.float64)
    wr = np.asarray(w_r, np.float64)
    wi = np.asarray(w_i, np.float64)
    cr = _ref_conv_transpose2d(x_r, wr, stride, padding, output_padding, dilation) \
        - _ref_conv_transpose2d(x_i, wi, stride, padding, output_padding, dilation)
    ci = _ref_conv_transpose2d(x_i, wr, stride, padding, output_padding, dilation) \
        + _ref_conv_transpose2d(x_r, wi, stride, padding, output_padding, dilation)
    out = np.stack([cr, ci], axis=-1)
    b = np.asarray(bias, np.float64)
    return out + b[None, :, None, None, :]


# ---------------------------------- main --------------------------------------

if __name__ == "__main__":
    key = jax.random.PRNGKey(0)

    configs = [
        # standard upsampling config
        dict(stride=2, padding=1, output_padding=1, dilation=1),
        # large padding (> dilation*(k-1)) to exercise the cropping regime
        dict(stride=2, padding=3, output_padding=0, dilation=1),
        # dilation with gcd(dilation, stride) > 1 -> phases with zero taps
        dict(stride=2, padding=0, output_padding=1, dilation=2),
    ]

    Cin, Cout, ksize = 4, 4, 3
    N, H, W = 2, 16, 16

    for cfg in configs:
        key, k_x, k_wr, k_wi, k_b = jax.random.split(key, 5)
        kH, kW = _pair(ksize)

        x = jax.random.normal(k_x, (N, Cin, H, W, 2), dtype=jnp.float32)
        fan_in = Cout * kH * kW
        bound = 1.0 / math.sqrt(fan_in)
        w_r = jax.random.uniform(k_wr, (Cin, Cout, kH, kW),
                                 minval=-bound, maxval=bound, dtype=jnp.float32)
        w_i = jax.random.uniform(k_wi, (Cin, Cout, kH, kW),
                                 minval=-bound, maxval=bound, dtype=jnp.float32)
        bias = jax.random.uniform(k_b, (Cout, 2),
                                  minval=-bound, maxval=bound, dtype=jnp.float32)

        out = complex_conv_transpose2d(
            x, w_r, w_i, bias,
            stride=cfg["stride"], padding=cfg["padding"],
            output_padding=cfg["output_padding"], dilation=cfg["dilation"])
        out = jax.block_until_ready(out)

        # kernel is now f32 end-to-end -> compare against a float64 reference
        ref = _ref_forward(np.asarray(x, np.float64),
                           np.asarray(w_r), np.asarray(w_i), np.asarray(bias),
                           _pair(cfg["stride"]), _pair(cfg["padding"]),
                           _pair(cfg["output_padding"]), _pair(cfg["dilation"]))

        assert out.shape == ref.shape, (cfg, out.shape, ref.shape)
        np.testing.assert_allclose(np.asarray(out), ref, rtol=2e-4, atol=2e-4)

    print("KERNEL_OK")
</pallas_src>

<mosaic_0001>
module attributes {stable_mosaic.version = 11 : i64} {
  func.func @kernel(%arg0: i32, %arg1: memref<9x8x8xf32, #tpu.memory_space<vmem>>, %arg2: memref<8x1xf32, #tpu.memory_space<vmem>>, %arg3: memref<1x8x340xf32, #tpu.memory_space<vmem>>, %arg4: memref<1x32x272xf32, #tpu.memory_space<vmem>>) attributes {dimension_semantics = [#tpu.dimension_semantics<parallel>], iteration_bounds = array<i64: 2>, scalar_prefetch = 0 : i64, scratch_operands = 0 : i64, tpu.core_type = #tpu.core_type<tc>, window_params = [{pipeline_mode = #tpu.pipeline_mode<synchronous>, transform_indices = @transform_0, window_bounds = array<i64: 9, 8, 8>}, {pipeline_mode = #tpu.pipeline_mode<synchronous>, transform_indices = @transform_1, window_bounds = array<i64: 8, 1>}, {transform_indices = @transform_2, window_bounds = array<i64: 1, 8, 340>}, {transform_indices = @transform_3, window_bounds = array<i64: 1, 32, 272>}]} {
    %c0 = arith.constant 0 : index
    %c0_0 = arith.constant 0 : index
    %0 = vector.load %arg2[%c0, %c0_0] : memref<8x1xf32, #tpu.memory_space<vmem>>, vector<8x1xf32>
    %c0_1 = arith.constant 0 : index
    %c0_2 = arith.constant 0 : index
    %c0_3 = arith.constant 0 : index
    %1 = vector.load %arg3[%c0_1, %c0_2, %c0_3] : memref<1x8x340xf32, #tpu.memory_space<vmem>>, vector<1x1x272xf32>
    %2 = vector.shape_cast %1 : vector<1x1x272xf32> to vector<1x272xf32>
    %c4 = arith.constant 4 : index
    %c0_4 = arith.constant 0 : index
    %c0_5 = arith.constant 0 : index
    %3 = vector.load %arg1[%c4, %c0_4, %c0_5] : memref<9x8x8xf32, #tpu.memory_space<vmem>>, vector<1x8x1xf32>
    %4 = vector.shape_cast %3 : vector<1x8x1xf32> to vector<8x1xf32>
    %5 = vector.broadcast %2 : vector<1x272xf32> to vector<8x272xf32>
    %6 = vector.broadcast %4 : vector<8x1xf32> to vector<8x272xf32>
    %7 = arith.mulf %5, %6 : vector<8x272xf32>
    %c0_6 = arith.constant 0 : index
    %c1 = arith.constant 1 : index
    %c0_7 = arith.constant 0 : index
    %8 = vector.load %arg3[%c0_6, %c1, %c0_7] : memref<1x8x340xf32, #tpu.memory_space<vmem>>, vector<1x1x272xf32>
    %9 = vector.shape_cast %8 : vector<1x1x272xf32> to vector<1x272xf32>
    %c4_8 = arith.constant 4 : index
    %c0_9 = arith.constant 0 : index
    %c1_10 = arith.constant 1 : index
    %10 = vector.load %arg1[%c4_8, %c0_9, %c1_10] : memref<9x8x8xf32, #tpu.memory_space<vmem>>, vector<1x8x1xf32>
    %11 = vector.shape_cast %10 : vector<1x8x1xf32> to vector<8x1xf32>
    %12 = vector.broadcast %9 : vector<1x272xf32> to vector<8x272xf32>
    %13 = vector.broadcast %11 : vector<8x1xf32> to vector<8x272xf32>
    %14 = arith.mulf %12, %13 : vector<8x272xf32>
    %15 = arith.addf %7, %14 : vector<8x272xf32>
    %c0_11 = arith.constant 0 : index
    %c2 = arith.constant 2 : index
    %c0_12 = arith.constant 0 : index
    %16 = vector.load %arg3[%c0_11, %c2, %c0_12] : memref<1x8x340xf32, #tpu.memory_space<vmem>>, vector<1x1x272xf32>
    %17 = vector.shape_cast %16 : vector<1x1x272xf32> to vector<1x272xf32>
    %c4_13 = arith.constant 4 : index
    %c0_14 = arith.constant 0 : index
    %c2_15 = arith.constant 2 : index
    %18 = vector.load %arg1[%c4_13, %c0_14, %c2_15] : memref<9x8x8xf32, #tpu.memory_space<vmem>>, vector<1x8x1xf32>
    %19 = vector.shape_cast %18 : vector<1x8x1xf32> to vector<8x1xf32>
    %20 = vector.broadcast %17 : vector<1x272xf32> to vector<8x272xf32>
    %21 = vector.broadcast %19 : vector<8x1xf32> to vector<8x272xf32>
    %22 = arith.mulf %20, %21 : vector<8x272xf32>
    %23 = arith.addf %15, %22 : vector<8x272xf32>
    %c0_16 = arith.constant 0 : index
    %c3 = arith.constant 3 : index
    %c0_17 = arith.constant 0 : index
    %24 = vector.load %arg3[%c0_16, %c3, %c0_17] : memref<1x8x340xf32, #tpu.memory_space<vmem>>, vector<1x1x272xf32>
    %25 = vector.shape_cast %24 : vector<1x1x272xf32> to vector<1x272xf32>
    %c4_18 = arith.constant 4 : index
    %c0_19 = arith.constant 0 : index
    %c3_20 = arith.constant 3 : index
    %26 = vector.load %arg1[%c4_18, %c0_19, %c3_20] : memref<9x8x8xf32, #tpu.memory_space<vmem>>, vector<1x8x1xf32>
    %27 = vector.shape_cast %26 : vector<1x8x1xf32> to vector<8x1xf32>
    %28 = vector.broadcast %25 : vector<1x272xf32> to vector<8x272xf32>
    %29 = vector.broadcast %27 : vector<8x1xf32> to vector<8x272xf32>
    %30 = arith.mulf %28, %29 : vector<8x272xf32>
    %31 = arith.addf %23, %30 : vector<8x272xf32>
    %c0_21 = arith.constant 0 : index
    %c4_22 = arith.constant 4 : index
    %c0_23 = arith.constant 0 : index
    %32 = vector.load %arg3[%c0_21, %c4_22, %c0_23] : memref<1x8x340xf32, #tpu.memory_space<vmem>>, vector<1x1x272xf32>
    %33 = vector.shape_cast %32 : vector<1x1x272xf32> to vector<1x272xf32>
    %c4_24 = arith.constant 4 : index
    %c0_25 = arith.constant 0 : index
    %c4_26 = arith.constant 4 : index
    %34 = vector.load %arg1[%c4_24, %c0_25, %c4_26] : memref<9x8x8xf32, #tpu.memory_space<vmem>>, vector<1x8x1xf32>
    %35 = vector.shape_cast %34 : vector<1x8x1xf32> to vector<8x1xf32>
    %36 = vector.broadcast %33 : vector<1x272xf32> to vector<8x272xf32>
    %37 = vector.broadcast %35 : vector<8x1xf32> to vector<8x272xf32>
    %38 = arith.mulf %36, %37 : vector<8x272xf32>
    %39 = arith.addf %31, %38 : vector<8x272xf32>
    %c0_27 = arith.constant 0 : index
    %c5 = arith.constant 5 : index
    %c0_28 = arith.constant 0 : index
    %40 = vector.load %arg3[%c0_27, %c5, %c0_28] : memref<1x8x340xf32, #tpu.memory_space<vmem>>, vector<1x1x272xf32>
    %41 = vector.shape_cast %40 : vector<1x1x272xf32> to vector<1x272xf32>
    %c4_29 = arith.constant 4 : index
    %c0_30 = arith.constant 0 : index
    %c5_31 = arith.constant 5 : index
    %42 = vector.load %arg1[%c4_29, %c0_30, %c5_31] : memref<9x8x8xf32, #tpu.memory_space<vmem>>, vector<1x8x1xf32>
    %43 = vector.shape_cast %42 : vector<1x8x1xf32> to vector<8x1xf32>
    %44 = vector.broadcast %41 : vector<1x272xf32> to vector<8x272xf32>
    %45 = vector.broadcast %43 : vector<8x1xf32> to vector<8x272xf32>
    %46 = arith.mulf %44, %45 : vector<8x272xf32>
    %47 = arith.addf %39, %46 : vector<8x272xf32>
    %c0_32 = arith.constant 0 : index
    %c6 = arith.constant 6 : index
    %c0_33 = arith.constant 0 : index
    %48 = vector.load %arg3[%c0_32, %c6, %c0_33] : memref<1x8x340xf32, #tpu.memory_space<vmem>>, vector<1x1x272xf32>
    %49 = vector.shape_cast %48 : vector<1x1x272xf32> to vector<1x272xf32>
    %c4_34 = arith.constant 4 : index
    %c0_35 = arith.constant 0 : index
    %c6_36 = arith.constant 6 : index
    %50 = vector.load %arg1[%c4_34, %c0_35, %c6_36] : memref<9x8x8xf32, #tpu.memory_space<vmem>>, vector<1x8x1xf32>
    %51 = vector.shape_cast %50 : vector<1x8x1xf32> to vector<8x1xf32>
    %52 = vector.broadcast %49 : vector<1x272xf32> to vector<8x272xf32>
    %53 = vector.broadcast %51 : vector<8x1xf32> to vector<8x272xf32>
    %54 = arith.mulf %52, %53 : vector<8x272xf32>
    %55 = arith.addf %47, %54 : vector<8x272xf32>
    %c0_37 = arith.constant 0 : index
    %c7 = arith.constant 7 : index
    %c0_38 = arith.constant 0 : index
    %56 = vector.load %arg3[%c0_37, %c7, %c0_38] : memref<1x8x340xf32, #tpu.memory_space<vmem>>, vector<1x1x272xf32>
    %57 = vector.shape_cast %56 : vector<1x1x272xf32> to vector<1x272xf32>
    %c4_39 = arith.constant 4 : index
    %c0_40 = arith.constant 0 : index
    %c7_41 = arith.constant 7 : index
    %58 = vector.load %arg1[%c4_39, %c0_40, %c7_41] : memref<9x8x8xf32, #tpu.memory_space<vmem>>, vector<1x8x1xf32>
    %59 = vector.shape_cast %58 : vector<1x8x1xf32> to vector<8x1xf32>
    %60 = vector.broadcast %57 : vector<1x272xf32> to vector<8x272xf32>
    %61 = vector.broadcast %59 : vector<8x1xf32> to vector<8x272xf32>
    %62 = arith.mulf %60, %61 : vector<8x272xf32>
    %63 = arith.addf %55, %62 : vector<8x272xf32>
    %64 = vector.broadcast %0 : vector<8x1xf32> to vector<8x272xf32>
    %65 = arith.addf %63, %64 : vector<8x272xf32>
    %c0_42 = arith.constant 0 : index
    %c0_43 = arith.constant 0 : index
    %c0_44 = arith.constant 0 : index
    %66 = vector.load %arg4[%c0_42, %c0_43, %c0_44] : memref<1x32x272xf32, #tpu.memory_space<vmem>>, vector<1x8x272xf32>
    %67 = vector.shape_cast %66 : vector<1x8x272xf32> to vector<8x272xf32>
    %68 = vector.shape_cast %65 : vector<8x272xf32> to vector<1x8x272xf32>
    tpu.vector_store %arg4[%c0_42, %c0_43, %c0_44], %68 {strides = array<i32>} : memref<1x32x272xf32, #tpu.memory_space<vmem>>, vector<1x8x272xf32>,
    %c0_45 = arith.constant 0 : index
    %c0_46 = arith.constant 0 : index
    %c1_47 = arith.constant 1 : index
    %69 = vector.load %arg3[%c0_45, %c0_46, %c1_47] : memref<1x8x340xf32, #tpu.memory_space<vmem>>, vector<1x1x272xf32>
    %70 = vector.shape_cast %69 : vector<1x1x272xf32> to vector<1x272xf32>
    %c3_48 = arith.constant 3 : index
    %c0_49 = arith.constant 0 : index
    %c0_50 = arith.constant 0 : index
    %71 = vector.load %arg1[%c3_48, %c0_49, %c0_50] : memref<9x8x8xf32, #tpu.memory_space<vmem>>, vector<1x8x1xf32>
    %72 = vector.shape_cast %71 : vector<1x8x1xf32> to vector<8x1xf32>
    %73 = vector.broadcast %70 : vector<1x272xf32> to vector<8x272xf32>
    %74 = vector.broadcast %72 : vector<8x1xf32> to vector<8x272xf32>
    %75 = arith.mulf %73, %74 : vector<8x272xf32>
    %c0_51 = arith.constant 0 : index
    %c1_52 = arith.constant 1 : index
    %c1_53 = arith.constant 1 : index
    %76 = vector.load %arg3[%c0_51, %c1_52, %c1_53] : memref<1x8x340xf32, #tpu.memory_space<vmem>>, vector<1x1x272xf32>
    %77 = vector.shape_cast %76 : vector<1x1x272xf32> to vector<1x272xf32>
    %c3_54 = arith.constant 3 : index
    %c0_55 = arith.constant 0 : index
    %c1_56 = arith.constant 1 : index
    %78 = vector.load %arg1[%c3_54, %c0_55, %c1_56] : memref<9x8x8xf32, #tpu.memory_space<vmem>>, vector<1x8x1xf32>
    %79 = vector.shape_cast %78 : vector<1x8x1xf32> to vector<8x1xf32>
    %80 = vector.broadcast %77 : vector<1x272xf32> to vector<8x272xf32>
    %81 = vector.broadcast %79 : vector<8x1xf32> to vector<8x272xf32>
    %82 = arith.mulf %80, %81 : vector<8x272xf32>
    %83 = arith.addf %75, %82 : vector<8x272xf32>
    %c0_57 = arith.constant 0 : index
    %c2_58 = arith.constant 2 : index
    %c1_59 = arith.constant 1 : index
    %84 = vector.load %arg3[%c0_57, %c2_58, %c1_59] : memref<1x8x340xf32, #tpu.memory_space<vmem>>, vector<1x1x272xf32>
    %85 = vector.shape_cast %84 : vector<1x1x272xf32> to vector<1x272xf32>
    %c3_60 = arith.constant 3 : index
    %c0_61 = arith.constant 0 : index
    %c2_62 = arith.constant 2 : index
    %86 = vector.load %arg1[%c3_60, %c0_61, %c2_62] : memref<9x8x8xf32, #tpu.memory_space<vmem>>, vector<1x8x1xf32>
    %87 = vector.shape_cast %86 : vector<1x8x1xf32> to vector<8x1xf32>
    %88 = vector.broadcast %85 : vector<1x272xf32> to vector<8x272xf32>
    %89 = vector.broadcast %87 : vector<8x1xf32> to vector<8x272xf32>
    %90 = arith.mulf %88, %89 : vector<8x272xf32>
    %91 = arith.addf %83, %90 : vector<8x272xf32>
    %c0_63 = arith.constant 0 : index
    %c3_64 = arith.constant 3 : index
    %c1_65 = arith.constant 1 : index
    %92 = vector.load %arg3[%c0_63, %c3_64, %c1_65] : memref<1x8x340xf32, #tpu.memory_space<vmem>>, vector<1x1x272xf32>
    %93 = vector.shape_cast %92 : vector<1x1x272xf32> to vector<1x272xf32>
    %c3_66 = arith.constant 3 : index
    %c0_67 = arith.constant 0 : index
    %c3_68 = arith.constant 3 : index
    %94 = vector.load %arg1[%c3_66, %c0_67, %c3_68] : memref<9x8x8xf32, #tpu.memory_space<vmem>>, vector<1x8x1xf32>
    %95 = vector.shape_cast %94 : vector<1x8x1xf32> to vector<8x1xf32>
    %96 = vector.broadcast %93 : vector<1x272xf32> to vector<8x272xf32>
    %97 = vector.broadcast %95 : vector<8x1xf32> to vector<8x272xf32>
    %98 = arith.mulf %96, %97 : vector<8x272xf32>
    %99 = arith.addf %91, %98 : vector<8x272xf32>
    %c0_69 = arith.constant 0 : index
    %c4_70 = arith.constant 4 : index
    %c1_71 = arith.constant 1 : index
    %100 = vector.load %arg3[%c0_69, %c4_70, %c1_71] : memref<1x8x340xf32, #tpu.memory_space<vmem>>, vector<1x1x272xf32>
    %101 = vector.shape_cast %100 : vector<1x1x272xf32> to vector<1x272xf32>
    %c3_72 = arith.constant 3 : index
    %c0_73 = arith.constant 0 : index
    %c4_74 = arith.constant 4 : index
    %102 = vector.load %arg1[%c3_72, %c0_73, %c4_74] : memref<9x8x8xf32, #tpu.memory_space<vmem>>, vector<1x8x1xf32>
    %103 = vector.shape_cast %102 : vector<1x8x1xf32> to vector<8x1xf32>
    %104 = vector.broadcast %101 : vector<1x272xf32> to vector<8x272xf32>
    %105 = vector.broadcast %103 : vector<8x1xf32> to vector<8x272xf32>
    %106 = arith.mulf %104, %105 : vector<8x272xf32>
    %107 = arith.addf %99, %106 : vector<8x272xf32>
    %c0_75 = arith.constant 0 : index
    %c5_76 = arith.constant 5 : index
    %c1_77 = arith.constant 1 : index
    %108 = vector.load %arg3[%c0_75, %c5_76, %c1_77] : memref<1x8x340xf32, #tpu.memory_space<vmem>>, vector<1x1x272xf32>
    %109 = vector.shape_cast %108 : vector<1x1x272xf32> to vector<1x272xf32>
    %c3_78 = arith.constant 3 : index
    %c0_79 = arith.constant 0 : index
    %c5_80 = arith.constant 5 : index
    %110 = vector.load %arg1[%c3_78, %c0_79, %c5_80] : memref<9x8x8xf32, #tpu.memory_space<vmem>>, vector<1x8x1xf32>
    %111 = vector.shape_cast %110 : vector<1x8x1xf32> to vector<8x1xf32>
    %112 = vector.broadcast %109 : vector<1x272xf32> to vector<8x272xf32>
    %113 = vector.broadcast %111 : vector<8x1xf32> to vector<8x272xf32>
    %114 = arith.mulf %112, %113 : vector<8x272xf32>
    %115 = arith.addf %107, %114 : vector<8x272xf32>
    %c0_81 = arith.constant 0 : index
    %c6_82 = arith.constant 6 : index
    %c1_83 = arith.constant 1 : index
    %116 = vector.load %arg3[%c0_81, %c6_82, %c1_83] : memref<1x8x340xf32, #tpu.memory_space<vmem>>, vector<1x1x272xf32>
    %117 = vector.shape_cast %116 : vector<1x1x272xf32> to vector<1x272xf32>
    %c3_84 = arith.constant 3 : index
    %c0_85 = arith.constant 0 : index
    %c6_86 = arith.constant 6 : index
    %118 = vector.load %arg1[%c3_84, %c0_85, %c6_86] : memref<9x8x8xf32, #tpu.memory_space<vmem>>, vector<1x8x1xf32>
    %119 = vector.shape_cast %118 : vector<1x8x1xf32> to vector<8x1xf32>
    %120 = vector.broadcast %117 : vector<1x272xf32> to vector<8x272xf32>
    %121 = vector.broadcast %119 : vector<8x1xf32> to vector<8x272xf32>
    %122 = arith.mulf %120, %121 : vector<8x272xf32>
    %123 = arith.addf %115, %122 : vector<8x272xf32>
    %c0_87 = arith.constant 0 : index
    %c7_88 = arith.constant 7 : index
    %c1_89 = arith.constant 1 : index
    %124 = vector.load %arg3[%c0_87, %c7_88, %c1_89] : memref<1x8x340xf32, #tpu.memory_space<vmem>>, vector<1x1x272xf32>
    %125 = vector.shape_cast %124 : vector<1x1x272xf32> to vector<1x272xf32>
    %c3_90 = arith.constant 3 : index
    %c0_91 = arith.constant 0 : index
    %c7_92 = arith.constant 7 : index
    %126 = vector.load %arg1[%c3_90, %c0_91, %c7_92] : memref<9x8x8xf32, #tpu.memory_space<vmem>>, vector<1x8x1xf32>
    %127 = vector.shape_cast %126 : vector<1x8x1xf32> to vector<8x1xf32>
    %128 = vector.broadcast %125 : vector<1x272xf32> to vector<8x272xf32>
    %129 = vector.broadcast %127 : vector<8x1xf32> to vector<8x272xf32>
    %130 = arith.mulf %128, %129 : vector<8x272xf32>
    %131 = arith.addf %123, %130 : vector<8x272xf32>
    %c0_93 = arith.constant 0 : index
    %c0_94 = arith.constant 0 : index
    %c0_95 = arith.constant 0 : index
    %132 = vector.load %arg3[%c0_93, %c0_94, %c0_95] : memref<1x8x340xf32, #tpu.memory_space<vmem>>, vector<1x1x272xf32>
    %133 = vector.shape_cast %132 : vector<1x1x272xf32> to vector<1x272xf32>
    %c5_96 = arith.constant 5 : index
    %c0_97 = arith.constant 0 : index
    %c0_98 = arith.constant 0 : index
    %134 = vector.load %arg1[%c5_96, %c0_97, %c0_98] : memref<9x8x8xf32, #tpu.memory_space<vmem>>, vector<1x8x1xf32>
    %135 = vector.shape_cast %134 : vector<1x8x1xf32> to vector<8x1xf32>
    %136 = vector.broadcast %133 : vector<1x272xf32> to vector<8x272xf32>
    %137 = vector.broadcast %135 : vector<8x1xf32> to vector<8x272xf32>
    %138 = arith.mulf %136, %137 : vector<8x272xf32>
    %139 = arith.addf %131, %138 : vector<8x272xf32>
    %c0_99 = arith.constant 0 : index
    %c1_100 = arith.constant 1 : index
    %c0_101 = arith.constant 0 : index
    %140 = vector.load %arg3[%c0_99, %c1_100, %c0_101] : memref<1x8x340xf32, #tpu.memory_space<vmem>>, vector<1x1x272xf32>
    %141 = vector.shape_cast %140 : vector<1x1x272xf32> to vector<1x272xf32>
    %c5_102 = arith.constant 5 : index
    %c0_103 = arith.constant 0 : index
    %c1_104 = arith.constant 1 : index
    %142 = vector.load %arg1[%c5_102, %c0_103, %c1_104] : memref<9x8x8xf32, #tpu.memory_space<vmem>>, vector<1x8x1xf32>
    %143 = vector.shape_cast %142 : vector<1x8x1xf32> to vector<8x1xf32>
    %144 = vector.broadcast %141 : vector<1x272xf32> to vector<8x272xf32>
    %145 = vector.broadcast %143 : vector<8x1xf32> to vector<8x272xf32>
    %146 = arith.mulf %144, %145 : vector<8x272xf32>
    %147 = arith.addf %139, %146 : vector<8x272xf32>
    %c0_105 = arith.constant 0 : index
    %c2_106 = arith.constant 2 : index
    %c0_107 = arith.constant 0 : index
    %148 = vector.load %arg3[%c0_105, %c2_106, %c0_107] : memref<1x8x340xf32, #tpu.memory_space<vmem>>, vector<1x1x272xf32>
    %149 = vector.shape_cast %148 : vector<1x1x272xf32> to vector<1x272xf32>
    %c5_108 = arith.constant 5 : index
    %c0_109 = arith.constant 0 : index
    %c2_110 = arith.constant 2 : index
    %150 = vector.load %arg1[%c5_108, %c0_109, %c2_110] : memref<9x8x8xf32, #tpu.memory_space<vmem>>, vector<1x8x1xf32>
    %151 = vector.shape_cast %150 : vector<1x8x1xf32> to vector<8x1xf32>
    %152 = vector.broadcast %149 : vector<1x272xf32> to vector<8x272xf32>
    %153 = vector.broadcast %151 : vector<8x1xf32> to vector<8x272xf32>
    %154 = arith.mulf %152, %153 : vector<8x272xf32>
    %155 = arith.addf %147, %154 : vector<8x272xf32>
    %c0_111 = arith.constant 0 : index
    %c3_112 = arith.constant 3 : index
    %c0_113 = arith.constant 0 : index
    %156 = vector.load %arg3[%c0_111, %c3_112, %c0_113] : memref<1x8x340xf32, #tpu.memory_space<vmem>>, vector<1x1x272xf32>
    %157 = vector.shape_cast %156 : vector<1x1x272xf32> to vector<1x272xf32>
    %c5_114 = arith.constant 5 : index
    %c0_115 = arith.constant 0 : index
    %c3_116 = arith.constant 3 : index
    %158 = vector.load %arg1[%c5_114, %c0_115, %c3_116] : memref<9x8x8xf32, #tpu.memory_space<vmem>>, vector<1x8x1xf32>
    %159 = vector.shape_cast %158 : vector<1x8x1xf32> to vector<8x1xf32>
    %160 = vector.broadcast %157 : vector<1x272xf32> to vector<8x272xf32>
    %161 = vector.broadcast %159 : vector<8x1xf32> to vector<8x272xf32>
    %162 = arith.mulf %160, %161 : vector<8x272xf32>
    %163 = arith.addf %155, %162 : vector<8x272xf32>
    %c0_117 = arith.constant 0 : index
    %c4_118 = arith.constant 4 : index
    %c0_119 = arith.constant 0 : index
    %164 = vector.load %arg3[%c0_117, %c4_118, %c0_119] : memref<1x8x340xf32, #tpu.memory_space<vmem>>, vector<1x1x272xf32>
    %165 = vector.shape_cast %164 : vector<1x1x272xf32> to vector<1x272xf32>
    %c5_120 = arith.constant 5 : index
    %c0_121 = arith.constant 0 : index
    %c4_122 = arith.constant 4 : index
    %166 = vector.load %arg1[%c5_120, %c0_121, %c4_122] : memref<9x8x8xf32, #tpu.memory_space<vmem>>, vector<1x8x1xf32>
    %167 = vector.shape_cast %166 : vector<1x8x1xf32> to vector<8x1xf32>
    %168 = vector.broadcast %165 : vector<1x272xf32> to vector<8x272xf32>
    %169 = vector.broadcast %167 : vector<8x1xf32> to vector<8x272xf32>
    %170 = arith.mulf %168, %169 : vector<8x272xf32>
    %171 = arith.addf %163, %170 : vector<8x272xf32>
    %c0_123 = arith.constant 0 : index
    %c5_124 = arith.constant 5 : index
    %c0_125 = arith.constant 0 : index
    %172 = vector.load %arg3[%c0_123, %c5_124, %c0_125] : memref<1x8x340xf32, #tpu.memory_space<vmem>>, vector<1x1x272xf32>
    %173 = vector.shape_cast %172 : vector<1x1x272xf32> to vector<1x272xf32>
    %c5_126 = arith.constant 5 : index
    %c0_127 = arith.constant 0 : index
    %c5_128 = arith.constant 5 : index
    %174 = vector.load %arg1[%c5_126, %c0_127, %c5_128] : memref<9x8x8xf32, #tpu.memory_space<vmem>>, vector<1x8x1xf32>
    %175 = vector.shape_cast %174 : vector<1x8x1xf32> to vector<8x1xf32>
    %176 = vector.broadcast %173 : vector<1x272xf32> to vector<8x272xf32>
    %177 = vector.broadcast %175 : vector<8x1xf32> to vector<8x272xf32>
    %178 = arith.mulf %176, %177 : vector<8x272xf32>
    %179 = arith.addf %171, %178 : vector<8x272xf32>
    %c0_129 = arith.constant 0 : index
    %c6_130 = arith.constant 6 : index
    %c0_131 = arith.constant 0 : index
    %180 = vector.load %arg3[%c0_129, %c6_130, %c0_131] : memref<1x8x340xf32, #tpu.memory_space<vmem>>, vector<1x1x272xf32>
    %181 = vector.shape_cast %180 : vector<1x1x272xf32> to vector<1x272xf32>
    %c5_132 = arith.constant 5 : index
    %c0_133 = arith.constant 0 : index
    %c6_134 = arith.constant 6 : index
    %182 = vector.load %arg1[%c5_132, %c0_133, %c6_134] : memref<9x8x8xf32, #tpu.memory_space<vmem>>, vector<1x8x1xf32>
    %183 = vector.shape_cast %182 : vector<1x8x1xf32> to vector<8x1xf32>
    %184 = vector.broadcast %181 : vector<1x272xf32> to vector<8x272xf32>
    %185 = vector.broadcast %183 : vector<8x1xf32> to vector<8x272xf32>
    %186 = arith.mulf %184, %185 : vector<8x272xf32>
    %187 = arith.addf %179, %186 : vector<8x272xf32>
    %c0_135 = arith.constant 0 : index
    %c7_136 = arith.constant 7 : index
    %c0_137 = arith.constant 0 : index
    %188 = vector.load %arg3[%c0_135, %c7_136, %c0_137] : memref<1x8x340xf32, #tpu.memory_space<vmem>>, vector<1x1x272xf32>
    %189 = vector.shape_cast %188 : vector<1x1x272xf32> to vector<1x272xf32>
    %c5_138 = arith.constant 5 : index
    %c0_139 = arith.constant 0 : index
    %c7_140 = arith.constant 7 : index
    %190 = vector.load %arg1[%c5_138, %c0_139, %c7_140] : memref<9x8x8xf32, #tpu.memory_space<vmem>>, vector<1x8x1xf32>
    %191 = vector.shape_cast %190 : vector<1x8x1xf32> to vector<8x1xf32>
    %192 = vector.broadcast %189 : vector<1x272xf32> to vector<8x272xf32>
    %193 = vector.broadcast %191 : vector<8x1xf32> to vector<8x272xf32>
    %194 = arith.mulf %192, %193 : vector<8x272xf32>
    %195 = arith.addf %187, %194 : vector<8x272xf32>
    %196 = vector.broadcast %0 : vector<8x1xf32> to vector<8x272xf32>
    %197 = arith.addf %195, %196 : vector<8x272xf32>
    %c0_141 = arith.constant 0 : index
    %c8 = arith.constant 8 : index
    %c0_142 = arith.constant 0 : index
    %198 = vector.load %arg4[%c0_141, %c8, %c0_142] : memref<1x32x272xf32, #tpu.memory_space<vmem>>, vector<1x8x272xf32>
    %199 = vector.shape_cast %198 : vector<1x8x272xf32> to vector<8x272xf32>
    %200 = vector.shape_cast %197 : vector<8x272xf32> to vector<1x8x272xf32>
    tpu.vector_store %arg4[%c0_141, %c8, %c0_142], %200 {strides = array<i32>} : memref<1x32x272xf32, #tpu.memory_space<vmem>>, vector<1x8x272xf32>,
    %c0_143 = arith.constant 0 : index
    %c0_144 = arith.constant 0 : index
    %c34 = arith.constant 34 : index
    %201 = vector.load %arg3[%c0_143, %c0_144, %c34] : memref<1x8x340xf32, #tpu.memory_space<vmem>>, vector<1x1x272xf32>
    %202 = vector.shape_cast %201 : vector<1x1x272xf32> to vector<1x272xf32>
    %c1_145 = arith.constant 1 : index
    %c0_146 = arith.constant 0 : index
    %c0_147 = arith.constant 0 : index
    %203 = vector.load %arg1[%c1_145, %c0_146, %c0_147] : memref<9x8x8xf32, #tpu.memory_space<vmem>>, vector<1x8x1xf32>
    %204 = vector.shape_cast %203 : vector<1x8x1xf32> to vector<8x1xf32>
    %205 = vector.broadcast %202 : vector<1x272xf32> to vector<8x272xf32>
    %206 = vector.broadcast %204 : vector<8x1xf32> to vector<8x272xf32>
    %207 = arith.mulf %205, %206 : vector<8x272xf32>
    %c0_148 = arith.constant 0 : index
    %c1_149 = arith.constant 1 : index
    %c34_150 = arith.constant 34 : index
    %208 = vector.load %arg3[%c0_148, %c1_149, %c34_150] : memref<1x8x340xf32, #tpu.memory_space<vmem>>, vector<1x1x272xf32>
    %209 = vector.shape_cast %208 : vector<1x1x272xf32> to vector<1x272xf32>
    %c1_151 = arith.constant 1 : index
    %c0_152 = arith.constant 0 : index
    %c1_153 = arith.constant 1 : index
    %210 = vector.load %arg1[%c1_151, %c0_152, %c1_153] : memref<9x8x8xf32, #tpu.memory_space<vmem>>, vector<1x8x1xf32>
    %211 = vector.shape_cast %210 : vector<1x8x1xf32> to vector<8x1xf32>
    %212 = vector.broadcast %209 : vector<1x272xf32> to vector<8x272xf32>
    %213 = vector.broadcast %211 : vector<8x1xf32> to vector<8x272xf32>
    %214 = arith.mulf %212, %213 : vector<8x272xf32>
    %215 = arith.addf %207, %214 : vector<8x272xf32>
    %c0_154 = arith.constant 0 : index
    %c2_155 = arith.constant 2 : index
    %c34_156 = arith.constant 34 : index
    %216 = vector.load %arg3[%c0_154, %c2_155, %c34_156] : memref<1x8x340xf32, #tpu.memory_space<vmem>>, vector<1x1x272xf32>
    %217 = vector.shape_cast %216 : vector<1x1x272xf32> to vector<1x272xf32>
    %c1_157 = arith.constant 1 : index
    %c0_158 = arith.constant 0 : index
    %c2_159 = arith.constant 2 : index
    %218 = vector.load %arg1[%c1_157, %c0_158, %c2_159] : memref<9x8x8xf32, #tpu.memory_space<vmem>>, vector<1x8x1xf32>
    %219 = vector.shape_cast %218 : vector<1x8x1xf32> to vector<8x1xf32>
    %220 = vector.broadcast %217 : vector<1x272xf32> to vector<8x272xf32>
    %221 = vector.broadcast %219 : vector<8x1xf32> to vector<8x272xf32>
    %222 = arith.mulf %220, %221 : vector<8x272xf32>
    %223 = arith.addf %215, %222 : vector<8x272xf32>
    %c0_160 = arith.constant 0 : index
    %c3_161 = arith.constant 3 : index
    %c34_162 = arith.constant 34 : index
    %224 = vector.load %arg3[%c0_160, %c3_161, %c34_162] : memref<1x8x340xf32, #tpu.memory_space<vmem>>, vector<1x1x272xf32>
    %225 = vector.shape_cast %224 : vector<1x1x272xf32> to vector<1x272xf32>
    %c1_163 = arith.constant 1 : index
    %c0_164 = arith.constant 0 : index
    %c3_165 = arith.constant 3 : index
    %226 = vector.load %arg1[%c1_163, %c0_164, %c3_165] : memref<9x8x8xf32, #tpu.memory_space<vmem>>, vector<1x8x1xf32>
    %227 = vector.shape_cast %226 : vector<1x8x1xf32> to vector<8x1xf32>
    %228 = vector.broadcast %225 : vector<1x272xf32> to vector<8x272xf32>
    %229 = vector.broadcast %227 : vector<8x1xf32> to vector<8x272xf32>
    %230 = arith.mulf %228, %229 : vector<8x272xf32>
    %231 = arith.addf %223, %230 : vector<8x272xf32>
    %c0_166 = arith.constant 0 : index
    %c4_167 = arith.constant 4 : index
    %c34_168 = arith.constant 34 : index
    %232 = vector.load %arg3[%c0_166, %c4_167, %c34_168] : memref<1x8x340xf32, #tpu.memory_space<vmem>>, vector<1x1x272xf32>
    %233 = vector.shape_cast %232 : vector<1x1x272xf32> to vector<1x272xf32>
    %c1_169 = arith.constant 1 : index
    %c0_170 = arith.constant 0 : index
    %c4_171 = arith.constant 4 : index
    %234 = vector.load %arg1[%c1_169, %c0_170, %c4_171] : memref<9x8x8xf32, #tpu.memory_space<vmem>>, vector<1x8x1xf32>
    %235 = vector.shape_cast %234 : vector<1x8x1xf32> to vector<8x1xf32>
    %236 = vector.broadcast %233 : vector<1x272xf32> to vector<8x272xf32>
    %237 = vector.broadcast %235 : vector<8x1xf32> to vector<8x272xf32>
    %238 = arith.mulf %236, %237 : vector<8x272xf32>
    %239 = arith.addf %231, %238 : vector<8x272xf32>
    %c0_172 = arith.constant 0 : index
    %c5_173 = arith.constant 5 : index
    %c34_174 = arith.constant 34 : index
    %240 = vector.load %arg3[%c0_172, %c5_173, %c34_174] : memref<1x8x340xf32, #tpu.memory_space<vmem>>, vector<1x1x272xf32>
    %241 = vector.shape_cast %240 : vector<1x1x272xf32> to vector<1x272xf32>
    %c1_175 = arith.constant 1 : index
    %c0_176 = arith.constant 0 : index
    %c5_177 = arith.constant 5 : index
    %242 = vector.load %arg1[%c1_175, %c0_176, %c5_177] : memref<9x8x8xf32, #tpu.memory_space<vmem>>, vector<1x8x1xf32>
    %243 = vector.shape_cast %242 : vector<1x8x1xf32> to vector<8x1xf32>
    %244 = vector.broadcast %241 : vector<1x272xf32> to vector<8x272xf32>
    %245 = vector.broadcast %243 : vector<8x1xf32> to vector<8x272xf32>
    %246 = arith.mulf %244, %245 : vector<8x272xf32>
    %247 = arith.addf %239, %246 : vector<8x272xf32>
    %c0_178 = arith.constant 0 : index
    %c6_179 = arith.constant 6 : index
    %c34_180 = arith.constant 34 : index
    %248 = vector.load %arg3[%c0_178, %c6_179, %c34_180] : memref<1x8x340xf32, #tpu.memory_space<vmem>>, vector<1x1x272xf32>
    %249 = vector.shape_cast %248 : vector<1x1x272xf32> to vector<1x272xf32>
    %c1_181 = arith.constant 1 : index
    %c0_182 = arith.constant 0 : index
    %c6_183 = arith.constant 6 : index
    %250 = vector.load %arg1[%c1_181, %c0_182, %c6_183] : memref<9x8x8xf32, #tpu.memory_space<vmem>>, vector<1x8x1xf32>
    %251 = vector.shape_cast %250 : vector<1x8x1xf32> to vector<8x1xf32>
    %252 = vector.broadcast %249 : vector<1x272xf32> to vector<8x272xf32>
    %253 = vector.broadcast %251 : vector<8x1xf32> to vector<8x272xf32>
    %254 = arith.mulf %252, %253 : vector<8x272xf32>
    %255 = arith.addf %247, %254 : vector<8x272xf32>
    %c0_184 = arith.constant 0 : index
    %c7_185 = arith.constant 7 : index
    %c34_186 = arith.constant 34 : index
    %256 = vector.load %arg3[%c0_184, %c7_185, %c34_186] : memref<1x8x340xf32, #tpu.memory_space<vmem>>, vector<1x1x272xf32>
    %257 = vector.shape_cast %256 : vector<1x1x272xf32> to vector<1x272xf32>
    %c1_187 = arith.constant 1 : index
    %c0_188 = arith.constant 0 : index
    %c7_189 = arith.constant 7 : index
    %258 = vector.load %arg1[%c1_187, %c0_188, %c7_189] : memref<9x8x8xf32, #tpu.memory_space<vmem>>, vector<1x8x1xf32>
    %259 = vector.shape_cast %258 : vector<1x8x1xf32> to vector<8x1xf32>
    %260 = vector.broadcast %257 : vector<1x272xf32> to vector<8x272xf32>
    %261 = vector.broadcast %259 : vector<8x1xf32> to vector<8x272xf32>
    %262 = arith.mulf %260, %261 : vector<8x272xf32>
    %263 = arith.addf %255, %262 : vector<8x272xf32>
    %c0_190 = arith.constant 0 : index
    %c0_191 = arith.constant 0 : index
    %c0_192 = arith.constant 0 : index
    %264 = vector.load %arg3[%c0_190, %c0_191, %c0_192] : memref<1x8x340xf32, #tpu.memory_space<vmem>>, vector<1x1x272xf32>
    %265 = vector.shape_cast %264 : vector<1x1x272xf32> to vector<1x272xf32>
    %c7_193 = arith.constant 7 : index
    %c0_194 = arith.constant 0 : index
    %c0_195 = arith.constant 0 : index
    %266 = vector.load %arg1[%c7_193, %c0_194, %c0_195] : memref<9x8x8xf32, #tpu.memory_space<vmem>>, vector<1x8x1xf32>
    %267 = vector.shape_cast %266 : vector<1x8x1xf32> to vector<8x1xf32>
    %268 = vector.broadcast %265 : vector<1x272xf32> to vector<8x272xf32>
    %269 = vector.broadcast %267 : vector<8x1xf32> to vector<8x272xf32>
    %270 = arith.mulf %268, %269 : vector<8x272xf32>
    %271 = arith.addf %263, %270 : vector<8x272xf32>
    %c0_196 = arith.constant 0 : index
    %c1_197 = arith.constant 1 : index
    %c0_198 = arith.constant 0 : index
    %272 = vector.load %arg3[%c0_196, %c1_197, %c0_198] : memref<1x8x340xf32, #tpu.memory_space<vmem>>, vector<1x1x272xf32>
    %273 = vector.shape_cast %272 : vector<1x1x272xf32> to vector<1x272xf32>
    %c7_199 = arith.constant 7 : index
    %c0_200 = arith.constant 0 : index
    %c1_201 = arith.constant 1 : index
    %274 = vector.load %arg1[%c7_199, %c0_200, %c1_201] : memref<9x8x8xf32, #tpu.memory_space<vmem>>, vector<1x8x1xf32>
    %275 = vector.shape_cast %274 : vector<1x8x1xf32> to vector<8x1xf32>
    %276 = vector.broadcast %273 : vector<1x272xf32> to vector<8x272xf32>
    %277 = vector.broadcast %275 : vector<8x1xf32> to vector<8x272xf32>
    %278 = arith.mulf %276, %277 : vector<8x272xf32>
    %279 = arith.addf %271, %278 : vector<8x272xf32>
    %c0_202 = arith.constant 0 : index
    %c2_203 = arith.constant 2 : index
    %c0_204 = arith.constant 0 : index
    %280 = vector.load %arg3[%c0_202, %c2_203, %c0_204] : memref<1x8x340xf32, #tpu.memory_space<vmem>>, vector<1x1x272xf32>
    %281 = vector.shape_cast %280 : vector<1x1x272xf32> to vector<1x272xf32>
    %c7_205 = arith.constant 7 : index
    %c0_206 = arith.constant 0 : index
    %c2_207 = arith.constant 2 : index
    %282 = vector.load %arg1[%c7_205, %c0_206, %c2_207] : memref<9x8x8xf32, #tpu.memory_space<vmem>>, vector<1x8x1xf32>
    %283 = vector.shape_cast %282 : vector<1x8x1xf32> to vector<8x1xf32>
    %284 = vector.broadcast %281 : vector<1x272xf32> to vector<8x272xf32>
    %285 = vector.broadcast %283 : vector<8x1xf32> to vector<8x272xf32>
    %286 = arith.mulf %284, %285 : vector<8x272xf32>
    %287 = arith.addf %279, %286 : vector<8x272xf32>
    %c0_208 = arith.constant 0 : index
    %c3_209 = arith.constant 3 : index
    %c0_210 = arith.constant 0 : index
    %288 = vector.load %arg3[%c0_208, %c3_209, %c0_210] : memref<1x8x340xf32, #tpu.memory_space<vmem>>, vector<1x1x272xf32>
    %289 = vector.shape_cast %288 : vector<1x1x272xf32> to vector<1x272xf32>
    %c7_211 = arith.constant 7 : index
    %c0_212 = arith.constant 0 : index
    %c3_213 = arith.constant 3 : index
    %290 = vector.load %arg1[%c7_211, %c0_212, %c3_213] : memref<9x8x8xf32, #tpu.memory_space<vmem>>, vector<1x8x1xf32>
    %291 = vector.shape_cast %290 : vector<1x8x1xf32> to vector<8x1xf32>
    %292 = vector.broadcast %289 : vector<1x272xf32> to vector<8x272xf32>
    %293 = vector.broadcast %291 : vector<8x1xf32> to vector<8x272xf32>
    %294 = arith.mulf %292, %293 : vector<8x272xf32>
    %295 = arith.addf %287, %294 : vector<8x272xf32>
    %c0_214 = arith.constant 0 : index
    %c4_215 = arith.constant 4 : index
    %c0_216 = arith.constant 0 : index
    %296 = vector.load %arg3[%c0_214, %c4_215, %c0_216] : memref<1x8x340xf32, #tpu.memory_space<vmem>>, vector<1x1x272xf32>
    %297 = vector.shape_cast %296 : vector<1x1x272xf32> to vector<1x272xf32>
    %c7_217 = arith.constant 7 : index
    %c0_218 = arith.constant 0 : index
    %c4_219 = arith.constant 4 : index
    %298 = vector.load %arg1[%c7_217, %c0_218, %c4_219] : memref<9x8x8xf32, #tpu.memory_space<vmem>>, vector<1x8x1xf32>
    %299 = vector.shape_cast %298 : vector<1x8x1xf32> to vector<8x1xf32>
    %300 = vector.broadcast %297 : vector<1x272xf32> to vector<8x272xf32>
    %301 = vector.broadcast %299 : vector<8x1xf32> to vector<8x272xf32>
    %302 = arith.mulf %300, %301 : vector<8x272xf32>
    %303 = arith.addf %295, %302 : vector<8x272xf32>
    %c0_220 = arith.constant 0 : index
    %c5_221 = arith.constant 5 : index
    %c0_222 = arith.constant 0 : index
    %304 = vector.load %arg3[%c0_220, %c5_221, %c0_222] : memref<1x8x340xf32, #tpu.memory_space<vmem>>, vector<1x1x272xf32>
    %305 = vector.shape_cast %304 : vector<1x1x272xf32> to vector<1x272xf32>
    %c7_223 = arith.constant 7 : index
    %c0_224 = arith.constant 0 : index
    %c5_225 = arith.constant 5 : index
    %306 = vector.load %arg1[%c7_223, %c0_224, %c5_225] : memref<9x8x8xf32, #tpu.memory_space<vmem>>, vector<1x8x1xf32>
    %307 = vector.shape_cast %306 : vector<1x8x1xf32> to vector<8x1xf32>
    %308 = vector.broadcast %305 : vector<1x272xf32> to vector<8x272xf32>
    %309 = vector.broadcast %307 : vector<8x1xf32> to vector<8x272xf32>
    %310 = arith.mulf %308, %309 : vector<8x272xf32>
    %311 = arith.addf %303, %310 : vector<8x272xf32>
    %c0_226 = arith.constant 0 : index
    %c6_227 = arith.constant 6 : index
    %c0_228 = arith.constant 0 : index
    %312 = vector.load %arg3[%c0_226, %c6_227, %c0_228] : memref<1x8x340xf32, #tpu.memory_space<vmem>>, vector<1x1x272xf32>
    %313 = vector.shape_cast %312 : vector<1x1x272xf32> to vector<1x272xf32>
    %c7_229 = arith.constant 7 : index
    %c0_230 = arith.constant 0 : index
    %c6_231 = arith.constant 6 : index
    %314 = vector.load %arg1[%c7_229, %c0_230, %c6_231] : memref<9x8x8xf32, #tpu.memory_space<vmem>>, vector<1x8x1xf32>
    %315 = vector.shape_cast %314 : vector<1x8x1xf32> to vector<8x1xf32>
    %316 = vector.broadcast %313 : vector<1x272xf32> to vector<8x272xf32>
    %317 = vector.broadcast %315 : vector<8x1xf32> to vector<8x272xf32>
    %318 = arith.mulf %316, %317 : vector<8x272xf32>
    %319 = arith.addf %311, %318 : vector<8x272xf32>
    %c0_232 = arith.constant 0 : index
    %c7_233 = arith.constant 7 : index
    %c0_234 = arith.constant 0 : index
    %320 = vector.load %arg3[%c0_232, %c7_233, %c0_234] : memref<1x8x340xf32, #tpu.memory_space<vmem>>, vector<1x1x272xf32>
    %321 = vector.shape_cast %320 : vector<1x1x272xf32> to vector<1x272xf32>
    %c7_235 = arith.constant 7 : index
    %c0_236 = arith.constant 0 : index
    %c7_237 = arith.constant 7 : index
    %322 = vector.load %arg1[%c7_235, %c0_236, %c7_237] : memref<9x8x8xf32, #tpu.memory_space<vmem>>, vector<1x8x1xf32>
    %323 = vector.shape_cast %322 : vector<1x8x1xf32> to vector<8x1xf32>
    %324 = vector.broadcast %321 : vector<1x272xf32> to vector<8x272xf32>
    %325 = vector.broadcast %323 : vector<8x1xf32> to vector<8x272xf32>
    %326 = arith.mulf %324, %325 : vector<8x272xf32>
    %327 = arith.addf %319, %326 : vector<8x272xf32>
    %328 = vector.broadcast %0 : vector<8x1xf32> to vector<8x272xf32>
    %329 = arith.addf %327, %328 : vector<8x272xf32>
    %c0_238 = arith.constant 0 : index
    %c16 = arith.constant 16 : index
    %c0_239 = arith.constant 0 : index
    %330 = vector.load %arg4[%c0_238, %c16, %c0_239] : memref<1x32x272xf32, #tpu.memory_space<vmem>>, vector<1x8x272xf32>
    %331 = vector.shape_cast %330 : vector<1x8x272xf32> to vector<8x272xf32>
    %332 = vector.shape_cast %329 : vector<8x272xf32> to vector<1x8x272xf32>
    tpu.vector_store %arg4[%c0_238, %c16, %c0_239], %332 {strides = array<i32>} : memref<1x32x272xf32, #tpu.memory_space<vmem>>, vector<1x8x272xf32>,
    %c0_240 = arith.constant 0 : index
    %c0_241 = arith.constant 0 : index
    %c35 = arith.constant 35 : index
    %333 = vector.load %arg3[%c0_240, %c0_241, %c35] : memref<1x8x340xf32, #tpu.memory_space<vmem>>, vector<1x1x272xf32>
    %334 = vector.shape_cast %333 : vector<1x1x272xf32> to vector<1x272xf32>
    %c0_242 = arith.constant 0 : index
    %c0_243 = arith.constant 0 : index
    %c0_244 = arith.constant 0 : index
    %335 = vector.load %arg1[%c0_242, %c0_243, %c0_244] : memref<9x8x8xf32, #tpu.memory_space<vmem>>, vector<1x8x1xf32>
    %336 = vector.shape_cast %335 : vector<1x8x1xf32> to vector<8x1xf32>
    %337 = vector.broadcast %334 : vector<1x272xf32> to vector<8x272xf32>
    %338 = vector.broadcast %336 : vector<8x1xf32> to vector<8x272xf32>
    %339 = arith.mulf %337, %338 : vector<8x272xf32>
    %c0_245 = arith.constant 0 : index
    %c1_246 = arith.constant 1 : index
    %c35_247 = arith.constant 35 : index
    %340 = vector.load %arg3[%c0_245, %c1_246, %c35_247] : memref<1x8x340xf32, #tpu.memory_space<vmem>>, vector<1x1x272xf32>
    %341 = vector.shape_cast %340 : vector<1x1x272xf32> to vector<1x272xf32>
    %c0_248 = arith.constant 0 : index
    %c0_249 = arith.constant 0 : index
    %c1_250 = arith.constant 1 : index
    %342 = vector.load %arg1[%c0_248, %c0_249, %c1_250] : memref<9x8x8xf32, #tpu.memory_space<vmem>>, vector<1x8x1xf32>
    %343 = vector.shape_cast %342 : vector<1x8x1xf32> to vector<8x1xf32>
    %344 = vector.broadcast %341 : vector<1x272xf32> to vector<8x272xf32>
    %345 = vector.broadcast %343 : vector<8x1xf32> to vector<8x272xf32>
    %346 = arith.mulf %344, %345 : vector<8x272xf32>
    %347 = arith.addf %339, %346 : vector<8x272xf32>
    %c0_251 = arith.constant 0 : index
    %c2_252 = arith.constant 2 : index
    %c35_253 = arith.constant 35 : index
    %348 = vector.load %arg3[%c0_251, %c2_252, %c35_253] : memref<1x8x340xf32, #tpu.memory_space<vmem>>, vector<1x1x272xf32>
    %349 = vector.shape_cast %348 : vector<1x1x272xf32> to vector<1x272xf32>
    %c0_254 = arith.constant 0 : index
    %c0_255 = arith.constant 0 : index
    %c2_256 = arith.constant 2 : index
    %350 = vector.load %arg1[%c0_254, %c0_255, %c2_256] : memref<9x8x8xf32, #tpu.memory_space<vmem>>, vector<1x8x1xf32>
    %351 = vector.shape_cast %350 : vector<1x8x1xf32> to vector<8x1xf32>
    %352 = vector.broadcast %349 : vector<1x272xf32> to vector<8x272xf32>
    %353 = vector.broadcast %351 : vector<8x1xf32> to vector<8x272xf32>
    %354 = arith.mulf %352, %353 : vector<8x272xf32>
    %355 = arith.addf %347, %354 : vector<8x272xf32>
    %c0_257 = arith.constant 0 : index
    %c3_258 = arith.constant 3 : index
    %c35_259 = arith.constant 35 : index
    %356 = vector.load %arg3[%c0_257, %c3_258, %c35_259] : memref<1x8x340xf32, #tpu.memory_space<vmem>>, vector<1x1x272xf32>
    %357 = vector.shape_cast %356 : vector<1x1x272xf32> to vector<1x272xf32>
    %c0_260 = arith.constant 0 : index
    %c0_261 = arith.constant 0 : index
    %c3_262 = arith.constant 3 : index
    %358 = vector.load %arg1[%c0_260, %c0_261, %c3_262] : memref<9x8x8xf32, #tpu.memory_space<vmem>>, vector<1x8x1xf32>
    %359 = vector.shape_cast %358 : vector<1x8x1xf32> to vector<8x1xf32>
    %360 = vector.broadcast %357 : vector<1x272xf32> to vector<8x272xf32>
    %361 = vector.broadcast %359 : vector<8x1xf32> to vector<8x272xf32>
    %362 = arith.mulf %360, %361 : vector<8x272xf32>
    %363 = arith.addf %355, %362 : vector<8x272xf32>
    %c0_263 = arith.constant 0 : index
    %c4_264 = arith.constant 4 : index
    %c35_265 = arith.constant 35 : index
    %364 = vector.load %arg3[%c0_263, %c4_264, %c35_265] : memref<1x8x340xf32, #tpu.memory_space<vmem>>, vector<1x1x272xf32>
    %365 = vector.shape_cast %364 : vector<1x1x272xf32> to vector<1x272xf32>
    %c0_266 = arith.constant 0 : index
    %c0_267 = arith.constant 0 : index
    %c4_268 = arith.constant 4 : index
    %366 = vector.load %arg1[%c0_266, %c0_267, %c4_268] : memref<9x8x8xf32, #tpu.memory_space<vmem>>, vector<1x8x1xf32>
    %367 = vector.shape_cast %366 : vector<1x8x1xf32> to vector<8x1xf32>
    %368 = vector.broadcast %365 : vector<1x272xf32> to vector<8x272xf32>
    %369 = vector.broadcast %367 : vector<8x1xf32> to vector<8x272xf32>
    %370 = arith.mulf %368, %369 : vector<8x272xf32>
    %371 = arith.addf %363, %370 : vector<8x272xf32>
    %c0_269 = arith.constant 0 : index
    %c5_270 = arith.constant 5 : index
    %c35_271 = arith.constant 35 : index
    %372 = vector.load %arg3[%c0_269, %c5_270, %c35_271] : memref<1x8x340xf32, #tpu.memory_space<vmem>>, vector<1x1x272xf32>
    %373 = vector.shape_cast %372 : vector<1x1x272xf32> to vector<1x272xf32>
    %c0_272 = arith.constant 0 : index
    %c0_273 = arith.constant 0 : index
    %c5_274 = arith.constant 5 : index
    %374 = vector.load %arg1[%c0_272, %c0_273, %c5_274] : memref<9x8x8xf32, #tpu.memory_space<vmem>>, vector<1x8x1xf32>
    %375 = vector.shape_cast %374 : vector<1x8x1xf32> to vector<8x1xf32>
    %376 = vector.broadcast %373 : vector<1x272xf32> to vector<8x272xf32>
    %377 = vector.broadcast %375 : vector<8x1xf32> to vector<8x272xf32>
    %378 = arith.mulf %376, %377 : vector<8x272xf32>
    %379 = arith.addf %371, %378 : vector<8x272xf32>
    %c0_275 = arith.constant 0 : index
    %c6_276 = arith.constant 6 : index
    %c35_277 = arith.constant 35 : index
    %380 = vector.load %arg3[%c0_275, %c6_276, %c35_277] : memref<1x8x340xf32, #tpu.memory_space<vmem>>, vector<1x1x272xf32>
    %381 = vector.shape_cast %380 : vector<1x1x272xf32> to vector<1x272xf32>
    %c0_278 = arith.constant 0 : index
    %c0_279 = arith.constant 0 : index
    %c6_280 = arith.constant 6 : index
    %382 = vector.load %arg1[%c0_278, %c0_279, %c6_280] : memref<9x8x8xf32, #tpu.memory_space<vmem>>, vector<1x8x1xf32>
    %383 = vector.shape_cast %382 : vector<1x8x1xf32> to vector<8x1xf32>
    %384 = vector.broadcast %381 : vector<1x272xf32> to vector<8x272xf32>
    %385 = vector.broadcast %383 : vector<8x1xf32> to vector<8x272xf32>
    %386 = arith.mulf %384, %385 : vector<8x272xf32>
    %387 = arith.addf %379, %386 : vector<8x272xf32>
    %c0_281 = arith.constant 0 : index
    %c7_282 = arith.constant 7 : index
    %c35_283 = arith.constant 35 : index
    %388 = vector.load %arg3[%c0_281, %c7_282, %c35_283] : memref<1x8x340xf32, #tpu.memory_space<vmem>>, vector<1x1x272xf32>
    %389 = vector.shape_cast %388 : vector<1x1x272xf32> to vector<1x272xf32>
    %c0_284 = arith.constant 0 : index
    %c0_285 = arith.constant 0 : index
    %c7_286 = arith.constant 7 : index
    %390 = vector.load %arg1[%c0_284, %c0_285, %c7_286] : memref<9x8x8xf32, #tpu.memory_space<vmem>>, vector<1x8x1xf32>
    %391 = vector.shape_cast %390 : vector<1x8x1xf32> to vector<8x1xf32>
    %392 = vector.broadcast %389 : vector<1x272xf32> to vector<8x272xf32>
    %393 = vector.broadcast %391 : vector<8x1xf32> to vector<8x272xf32>
    %394 = arith.mulf %392, %393 : vector<8x272xf32>
    %395 = arith.addf %387, %394 : vector<8x272xf32>
    %c0_287 = arith.constant 0 : index
    %c0_288 = arith.constant 0 : index
    %c34_289 = arith.constant 34 : index
    %396 = vector.load %arg3[%c0_287, %c0_288, %c34_289] : memref<1x8x340xf32, #tpu.memory_space<vmem>>, vector<1x1x272xf32>
    %397 = vector.shape_cast %396 : vector<1x1x272xf32> to vector<1x272xf32>
    %c2_290 = arith.constant 2 : index
    %c0_291 = arith.constant 0 : index
    %c0_292 = arith.constant 0 : index
    %398 = vector.load %arg1[%c2_290, %c0_291, %c0_292] : memref<9x8x8xf32, #tpu.memory_space<vmem>>, vector<1x8x1xf32>
    %399 = vector.shape_cast %398 : vector<1x8x1xf32> to vector<8x1xf32>
    %400 = vector.broadcast %397 : vector<1x272xf32> to vector<8x272xf32>
    %401 = vector.broadcast %399 : vector<8x1xf32> to vector<8x272xf32>
    %402 = arith.mulf %400, %401 : vector<8x272xf32>
    %403 = arith.addf %395, %402 : vector<8x272xf32>
    %c0_293 = arith.constant 0 : index
    %c1_294 = arith.constant 1 : index
    %c34_295 = arith.constant 34 : index
    %404 = vector.load %arg3[%c0_293, %c1_294, %c34_295] : memref<1x8x340xf32, #tpu.memory_space<vmem>>, vector<1x1x272xf32>
    %405 = vector.shape_cast %404 : vector<1x1x272xf32> to vector<1x272xf32>
    %c2_296 = arith.constant 2 : index
    %c0_297 = arith.constant 0 : index
    %c1_298 = arith.constant 1 : index
    %406 = vector.load %arg1[%c2_296, %c0_297, %c1_298] : memref<9x8x8xf32, #tpu.memory_space<vmem>>, vector<1x8x1xf32>
    %407 = vector.shape_cast %406 : vector<1x8x1xf32> to vector<8x1xf32>
    %408 = vector.broadcast %405 : vector<1x272xf32> to vector<8x272xf32>
    %409 = vector.broadcast %407 : vector<8x1xf32> to vector<8x272xf32>
    %410 = arith.mulf %408, %409 : vector<8x272xf32>
    %411 = arith.addf %403, %410 : vector<8x272xf32>
    %c0_299 = arith.constant 0 : index
    %c2_300 = arith.constant 2 : index
    %c34_301 = arith.constant 34 : index
    %412 = vector.load %arg3[%c0_299, %c2_300, %c34_301] : memref<1x8x340xf32, #tpu.memory_space<vmem>>, vector<1x1x272xf32>
    %413 = vector.shape_cast %412 : vector<1x1x272xf32> to vector<1x272xf32>
    %c2_302 = arith.constant 2 : index
    %c0_303 = arith.constant 0 : index
    %c2_304 = arith.constant 2 : index
    %414 = vector.load %arg1[%c2_302, %c0_303, %c2_304] : memref<9x8x8xf32, #tpu.memory_space<vmem>>, vector<1x8x1xf32>
    %415 = vector.shape_cast %414 : vector<1x8x1xf32> to vector<8x1xf32>
    %416 = vector.broadcast %413 : vector<1x272xf32> to vector<8x272xf32>
    %417 = vector.broadcast %415 : vector<8x1xf32> to vector<8x272xf32>
    %418 = arith.mulf %416, %417 : vector<8x272xf32>
    %419 = arith.addf %411, %418 : vector<8x272xf32>
    %c0_305 = arith.constant 0 : index
    %c3_306 = arith.constant 3 : index
    %c34_307 = arith.constant 34 : index
    %420 = vector.load %arg3[%c0_305, %c3_306, %c34_307] : memref<1x8x340xf32, #tpu.memory_space<vmem>>, vector<1x1x272xf32>
    %421 = vector.shape_cast %420 : vector<1x1x272xf32> to vector<1x272xf32>
    %c2_308 = arith.constant 2 : index
    %c0_309 = arith.constant 0 : index
    %c3_310 = arith.constant 3 : index
    %422 = vector.load %arg1[%c2_308, %c0_309, %c3_310] : memref<9x8x8xf32, #tpu.memory_space<vmem>>, vector<1x8x1xf32>
    %423 = vector.shape_cast %422 : vector<1x8x1xf32> to vector<8x1xf32>
    %424 = vector.broadcast %421 : vector<1x272xf32> to vector<8x272xf32>
    %425 = vector.broadcast %423 : vector<8x1xf32> to vector<8x272xf32>
    %426 = arith.mulf %424, %425 : vector<8x272xf32>
    %427 = arith.addf %419, %426 : vector<8x272xf32>
    %c0_311 = arith.constant 0 : index
    %c4_312 = arith.constant 4 : index
    %c34_313 = arith.constant 34 : index
    %428 = vector.load %arg3[%c0_311, %c4_312, %c34_313] : memref<1x8x340xf32, #tpu.memory_space<vmem>>, vector<1x1x272xf32>
    %429 = vector.shape_cast %428 : vector<1x1x272xf32> to vector<1x272xf32>
    %c2_314 = arith.constant 2 : index
    %c0_315 = arith.constant 0 : index
    %c4_316 = arith.constant 4 : index
    %430 = vector.load %arg1[%c2_314, %c0_315, %c4_316] : memref<9x8x8xf32, #tpu.memory_space<vmem>>, vector<1x8x1xf32>
    %431 = vector.shape_cast %430 : vector<1x8x1xf32> to vector<8x1xf32>
    %432 = vector.broadcast %429 : vector<1x272xf32> to vector<8x272xf32>
    %433 = vector.broadcast %431 : vector<8x1xf32> to vector<8x272xf32>
    %434 = arith.mulf %432, %433 : vector<8x272xf32>
    %435 = arith.addf %427, %434 : vector<8x272xf32>
    %c0_317 = arith.constant 0 : index
    %c5_318 = arith.constant 5 : index
    %c34_319 = arith.constant 34 : index
    %436 = vector.load %arg3[%c0_317, %c5_318, %c34_319] : memref<1x8x340xf32, #tpu.memory_space<vmem>>, vector<1x1x272xf32>
    %437 = vector.shape_cast %436 : vector<1x1x272xf32> to vector<1x272xf32>
    %c2_320 = arith.constant 2 : index
    %c0_321 = arith.constant 0 : index
    %c5_322 = arith.constant 5 : index
    %438 = vector.load %arg1[%c2_320, %c0_321, %c5_322] : memref<9x8x8xf32, #tpu.memory_space<vmem>>, vector<1x8x1xf32>
    %439 = vector.shape_cast %438 : vector<1x8x1xf32> to vector<8x1xf32>
    %440 = vector.broadcast %437 : vector<1x272xf32> to vector<8x272xf32>
    %441 = vector.broadcast %439 : vector<8x1xf32> to vector<8x272xf32>
    %442 = arith.mulf %440, %441 : vector<8x272xf32>
    %443 = arith.addf %435, %442 : vector<8x272xf32>
    %c0_323 = arith.constant 0 : index
    %c6_324 = arith.constant 6 : index
    %c34_325 = arith.constant 34 : index
    %444 = vector.load %arg3[%c0_323, %c6_324, %c34_325] : memref<1x8x340xf32, #tpu.memory_space<vmem>>, vector<1x1x272xf32>
    %445 = vector.shape_cast %444 : vector<1x1x272xf32> to vector<1x272xf32>
    %c2_326 = arith.constant 2 : index
    %c0_327 = arith.constant 0 : index
    %c6_328 = arith.constant 6 : index
    %446 = vector.load %arg1[%c2_326, %c0_327, %c6_328] : memref<9x8x8xf32, #tpu.memory_space<vmem>>, vector<1x8x1xf32>
    %447 = vector.shape_cast %446 : vector<1x8x1xf32> to vector<8x1xf32>
    %448 = vector.broadcast %445 : vector<1x272xf32> to vector<8x272xf32>
    %449 = vector.broadcast %447 : vector<8x1xf32> to vector<8x272xf32>
    %450 = arith.mulf %448, %449 : vector<8x272xf32>
    %451 = arith.addf %443, %450 : vector<8x272xf32>
    %c0_329 = arith.constant 0 : index
    %c7_330 = arith.constant 7 : index
    %c34_331 = arith.constant 34 : index
    %452 = vector.load %arg3[%c0_329, %c7_330, %c34_331] : memref<1x8x340xf32, #tpu.memory_space<vmem>>, vector<1x1x272xf32>
    %453 = vector.shape_cast %452 : vector<1x1x272xf32> to vector<1x272xf32>
    %c2_332 = arith.constant 2 : index
    %c0_333 = arith.constant 0 : index
    %c7_334 = arith.constant 7 : index
    %454 = vector.load %arg1[%c2_332, %c0_333, %c7_334] : memref<9x8x8xf32, #tpu.memory_space<vmem>>, vector<1x8x1xf32>
    %455 = vector.shape_cast %454 : vector<1x8x1xf32> to vector<8x1xf32>
    %456 = vector.broadcast %453 : vector<1x272xf32> to vector<8x272xf32>
    %457 = vector.broadcast %455 : vector<8x1xf32> to vector<8x272xf32>
    %458 = arith.mulf %456, %457 : vector<8x272xf32>
    %459 = arith.addf %451, %458 : vector<8x272xf32>
    %c0_335 = arith.constant 0 : index
    %c0_336 = arith.constant 0 : index
    %c1_337 = arith.constant 1 : index
    %460 = vector.load %arg3[%c0_335, %c0_336, %c1_337] : memref<1x8x340xf32, #tpu.memory_space<vmem>>, vector<1x1x272xf32>
    %461 = vector.shape_cast %460 : vector<1x1x272xf32> to vector<1x272xf32>
    %c6_338 = arith.constant 6 : index
    %c0_339 = arith.constant 0 : index
    %c0_340 = arith.constant 0 : index
    %462 = vector.load %arg1[%c6_338, %c0_339, %c0_340] : memref<9x8x8xf32, #tpu.memory_space<vmem>>, vector<1x8x1xf32>
    %463 = vector.shape_cast %462 : vector<1x8x1xf32> to vector<8x1xf32>
    %464 = vector.broadcast %461 : vector<1x272xf32> to vector<8x272xf32>
    %465 = vector.broadcast %463 : vector<8x1xf32> to vector<8x272xf32>
    %466 = arith.mulf %464, %465 : vector<8x272xf32>
    %467 = arith.addf %459, %466 : vector<8x272xf32>
    %c0_341 = arith.constant 0 : index
    %c1_342 = arith.constant 1 : index
    %c1_343 = arith.constant 1 : index
    %468 = vector.load %arg3[%c0_341, %c1_342, %c1_343] : memref<1x8x340xf32, #tpu.memory_space<vmem>>, vector<1x1x272xf32>
    %469 = vector.shape_cast %468 : vector<1x1x272xf32> to vector<1x272xf32>
    %c6_344 = arith.constant 6 : index
    %c0_345 = arith.constant 0 : index
    %c1_346 = arith.constant 1 : index
    %470 = vector.load %arg1[%c6_344, %c0_345, %c1_346] : memref<9x8x8xf32, #tpu.memory_space<vmem>>, vector<1x8x1xf32>
    %471 = vector.shape_cast %470 : vector<1x8x1xf32> to vector<8x1xf32>
    %472 = vector.broadcast %469 : vector<1x272xf32> to vector<8x272xf32>
    %473 = vector.broadcast %471 : vector<8x1xf32> to vector<8x272xf32>
    %474 = arith.mulf %472, %473 : vector<8x272xf32>
    %475 = arith.addf %467, %474 : vector<8x272xf32>
    %c0_347 = arith.constant 0 : index
    %c2_348 = arith.constant 2 : index
    %c1_349 = arith.constant 1 : index
    %476 = vector.load %arg3[%c0_347, %c2_348, %c1_349] : memref<1x8x340xf32, #tpu.memory_space<vmem>>, vector<1x1x272xf32>
    %477 = vector.shape_cast %476 : vector<1x1x272xf32> to vector<1x272xf32>
    %c6_350 = arith.constant 6 : index
    %c0_351 = arith.constant 0 : index
    %c2_352 = arith.constant 2 : index
    %478 = vector.load %arg1[%c6_350, %c0_351, %c2_352] : memref<9x8x8xf32, #tpu.memory_space<vmem>>, vector<1x8x1xf32>
    %479 = vector.shape_cast %478 : vector<1x8x1xf32> to vector<8x1xf32>
    %480 = vector.broadcast %477 : vector<1x272xf32> to vector<8x272xf32>
    %481 = vector.broadcast %479 : vector<8x1xf32> to vector<8x272xf32>
    %482 = arith.mulf %480, %481 : vector<8x272xf32>
    %483 = arith.addf %475, %482 : vector<8x272xf32>
    %c0_353 = arith.constant 0 : index
    %c3_354 = arith.constant 3 : index
    %c1_355 = arith.constant 1 : index
    %484 = vector.load %arg3[%c0_353, %c3_354, %c1_355] : memref<1x8x340xf32, #tpu.memory_space<vmem>>, vector<1x1x272xf32>
    %485 = vector.shape_cast %484 : vector<1x1x272xf32> to vector<1x272xf32>
    %c6_356 = arith.constant 6 : index
    %c0_357 = arith.constant 0 : index
    %c3_358 = arith.constant 3 : index
    %486 = vector.load %arg1[%c6_356, %c0_357, %c3_358] : memref<9x8x8xf32, #tpu.memory_space<vmem>>, vector<1x8x1xf32>
    %487 = vector.shape_cast %486 : vector<1x8x1xf32> to vector<8x1xf32>
    %488 = vector.broadcast %485 : vector<1x272xf32> to vector<8x272xf32>
    %489 = vector.broadcast %487 : vector<8x1xf32> to vector<8x272xf32>
    %490 = arith.mulf %488, %489 : vector<8x272xf32>
    %491 = arith.addf %483, %490 : vector<8x272xf32>
    %c0_359 = arith.constant 0 : index
    %c4_360 = arith.constant 4 : index
    %c1_361 = arith.constant 1 : index
    %492 = vector.load %arg3[%c0_359, %c4_360, %c1_361] : memref<1x8x340xf32, #tpu.memory_space<vmem>>, vector<1x1x272xf32>
    %493 = vector.shape_cast %492 : vector<1x1x272xf32> to vector<1x272xf32>
    %c6_362 = arith.constant 6 : index
    %c0_363 = arith.constant 0 : index
    %c4_364 = arith.constant 4 : index
    %494 = vector.load %arg1[%c6_362, %c0_363, %c4_364] : memref<9x8x8xf32, #tpu.memory_space<vmem>>, vector<1x8x1xf32>
    %495 = vector.shape_cast %494 : vector<1x8x1xf32> to vector<8x1xf32>
    %496 = vector.broadcast %493 : vector<1x272xf32> to vector<8x272xf32>
    %497 = vector.broadcast %495 : vector<8x1xf32> to vector<8x272xf32>
    %498 = arith.mulf %496, %497 : vector<8x272xf32>
    %499 = arith.addf %491, %498 : vector<8x272xf32>
    %c0_365 = arith.constant 0 : index
    %c5_366 = arith.constant 5 : index
    %c1_367 = arith.constant 1 : index
    %500 = vector.load %arg3[%c0_365, %c5_366, %c1_367] : memref<1x8x340xf32, #tpu.memory_space<vmem>>, vector<1x1x272xf32>
    %501 = vector.shape_cast %500 : vector<1x1x272xf32> to vector<1x272xf32>
    %c6_368 = arith.constant 6 : index
    %c0_369 = arith.constant 0 : index
    %c5_370 = arith.constant 5 : index
    %502 = vector.load %arg1[%c6_368, %c0_369, %c5_370] : memref<9x8x8xf32, #tpu.memory_space<vmem>>, vector<1x8x1xf32>
    %503 = vector.shape_cast %502 : vector<1x8x1xf32> to vector<8x1xf32>
    %504 = vector.broadcast %501 : vector<1x272xf32> to vector<8x272xf32>
    %505 = vector.broadcast %503 : vector<8x1xf32> to vector<8x272xf32>
    %506 = arith.mulf %504, %505 : vector<8x272xf32>
    %507 = arith.addf %499, %506 : vector<8x272xf32>
    %c0_371 = arith.constant 0 : index
    %c6_372 = arith.constant 6 : index
    %c1_373 = arith.constant 1 : index
    %508 = vector.load %arg3[%c0_371, %c6_372, %c1_373] : memref<1x8x340xf32, #tpu.memory_space<vmem>>, vector<1x1x272xf32>
    %509 = vector.shape_cast %508 : vector<1x1x272xf32> to vector<1x272xf32>
    %c6_374 = arith.constant 6 : index
    %c0_375 = arith.constant 0 : index
    %c6_376 = arith.constant 6 : index
    %510 = vector.load %arg1[%c6_374, %c0_375, %c6_376] : memref<9x8x8xf32, #tpu.memory_space<vmem>>, vector<1x8x1xf32>
    %511 = vector.shape_cast %510 : vector<1x8x1xf32> to vector<8x1xf32>
    %512 = vector.broadcast %509 : vector<1x272xf32> to vector<8x272xf32>
    %513 = vector.broadcast %511 : vector<8x1xf32> to vector<8x272xf32>
    %514 = arith.mulf %512, %513 : vector<8x272xf32>
    %515 = arith.addf %507, %514 : vector<8x272xf32>
    %c0_377 = arith.constant 0 : index
    %c7_378 = arith.constant 7 : index
    %c1_379 = arith.constant 1 : index
    %516 = vector.load %arg3[%c0_377, %c7_378, %c1_379] : memref<1x8x340xf32, #tpu.memory_space<vmem>>, vector<1x1x272xf32>
    %517 = vector.shape_cast %516 : vector<1x1x272xf32> to vector<1x272xf32>
    %c6_380 = arith.constant 6 : index
    %c0_381 = arith.constant 0 : index
    %c7_382 = arith.constant 7 : index
    %518 = vector.load %arg1[%c6_380, %c0_381, %c7_382] : memref<9x8x8xf32, #tpu.memory_space<vmem>>, vector<1x8x1xf32>
    %519 = vector.shape_cast %518 : vector<1x8x1xf32> to vector<8x1xf32>
    %520 = vector.broadcast %517 : vector<1x272xf32> to vector<8x272xf32>
    %521 = vector.broadcast %519 : vector<8x1xf32> to vector<8x272xf32>
    %522 = arith.mulf %520, %521 : vector<8x272xf32>
    %523 = arith.addf %515, %522 : vector<8x272xf32>
    %c0_383 = arith.constant 0 : index
    %c0_384 = arith.constant 0 : index
    %c0_385 = arith.constant 0 : index
    %524 = vector.load %arg3[%c0_383, %c0_384, %c0_385] : memref<1x8x340xf32, #tpu.memory_space<vmem>>, vector<1x1x272xf32>
    %525 = vector.shape_cast %524 : vector<1x1x272xf32> to vector<1x272xf32>
    %c8_386 = arith.constant 8 : index
    %c0_387 = arith.constant 0 : index
    %c0_388 = arith.constant 0 : index
    %526 = vector.load %arg1[%c8_386, %c0_387, %c0_388] : memref<9x8x8xf32, #tpu.memory_space<vmem>>, vector<1x8x1xf32>
    %527 = vector.shape_cast %526 : vector<1x8x1xf32> to vector<8x1xf32>
    %528 = vector.broadcast %525 : vector<1x272xf32> to vector<8x272xf32>
    %529 = vector.broadcast %527 : vector<8x1xf32> to vector<8x272xf32>
    %530 = arith.mulf %528, %529 : vector<8x272xf32>
    %531 = arith.addf %523, %530 : vector<8x272xf32>
    %c0_389 = arith.constant 0 : index
    %c1_390 = arith.constant 1 : index
    %c0_391 = arith.constant 0 : index
    %532 = vector.load %arg3[%c0_389, %c1_390, %c0_391] : memref<1x8x340xf32, #tpu.memory_space<vmem>>, vector<1x1x272xf32>
    %533 = vector.shape_cast %532 : vector<1x1x272xf32> to vector<1x272xf32>
    %c8_392 = arith.constant 8 : index
    %c0_393 = arith.constant 0 : index
    %c1_394 = arith.constant 1 : index
    %534 = vector.load %arg1[%c8_392, %c0_393, %c1_394] : memref<9x8x8xf32, #tpu.memory_space<vmem>>, vector<1x8x1xf32>
    %535 = vector.shape_cast %534 : vector<1x8x1xf32> to vector<8x1xf32>
    %536 = vector.broadcast %533 : vector<1x272xf32> to vector<8x272xf32>
    %537 = vector.broadcast %535 : vector<8x1xf32> to vector<8x272xf32>
    %538 = arith.mulf %536, %537 : vector<8x272xf32>
    %539 = arith.addf %531, %538 : vector<8x272xf32>
    %c0_395 = arith.constant 0 : index
    %c2_396 = arith.constant 2 : index
    %c0_397 = arith.constant 0 : index
    %540 = vector.load %arg3[%c0_395, %c2_396, %c0_397] : memref<1x8x340xf32, #tpu.memory_space<vmem>>, vector<1x1x272xf32>
    %541 = vector.shape_cast %540 : vector<1x1x272xf32> to vector<1x272xf32>
    %c8_398 = arith.constant 8 : index
    %c0_399 = arith.constant 0 : index
    %c2_400 = arith.constant 2 : index
    %542 = vector.load %arg1[%c8_398, %c0_399, %c2_400] : memref<9x8x8xf32, #tpu.memory_space<vmem>>, vector<1x8x1xf32>
    %543 = vector.shape_cast %542 : vector<1x8x1xf32> to vector<8x1xf32>
    %544 = vector.broadcast %541 : vector<1x272xf32> to vector<8x272xf32>
    %545 = vector.broadcast %543 : vector<8x1xf32> to vector<8x272xf32>
    %546 = arith.mulf %544, %545 : vector<8x272xf32>
    %547 = arith.addf %539, %546 : vector<8x272xf32>
    %c0_401 = arith.constant 0 : index
    %c3_402 = arith.constant 3 : index
    %c0_403 = arith.constant 0 : index
    %548 = vector.load %arg3[%c0_401, %c3_402, %c0_403] : memref<1x8x340xf32, #tpu.memory_space<vmem>>, vector<1x1x272xf32>
    %549 = vector.shape_cast %548 : vector<1x1x272xf32> to vector<1x272xf32>
    %c8_404 = arith.constant 8 : index
    %c0_405 = arith.constant 0 : index
    %c3_406 = arith.constant 3 : index
    %550 = vector.load %arg1[%c8_404, %c0_405, %c3_406] : memref<9x8x8xf32, #tpu.memory_space<vmem>>, vector<1x8x1xf32>
    %551 = vector.shape_cast %550 : vector<1x8x1xf32> to vector<8x1xf32>
    %552 = vector.broadcast %549 : vector<1x272xf32> to vector<8x272xf32>
    %553 = vector.broadcast %551 : vector<8x1xf32> to vector<8x272xf32>
    %554 = arith.mulf %552, %553 : vector<8x272xf32>
    %555 = arith.addf %547, %554 : vector<8x272xf32>
    %c0_407 = arith.constant 0 : index
    %c4_408 = arith.constant 4 : index
    %c0_409 = arith.constant 0 : index
    %556 = vector.load %arg3[%c0_407, %c4_408, %c0_409] : memref<1x8x340xf32, #tpu.memory_space<vmem>>, vector<1x1x272xf32>
    %557 = vector.shape_cast %556 : vector<1x1x272xf32> to vector<1x272xf32>
    %c8_410 = arith.constant 8 : index
    %c0_411 = arith.constant 0 : index
    %c4_412 = arith.constant 4 : index
    %558 = vector.load %arg1[%c8_410, %c0_411, %c4_412] : memref<9x8x8xf32, #tpu.memory_space<vmem>>, vector<1x8x1xf32>
    %559 = vector.shape_cast %558 : vector<1x8x1xf32> to vector<8x1xf32>
    %560 = vector.broadcast %557 : vector<1x272xf32> to vector<8x272xf32>
    %561 = vector.broadcast %559 : vector<8x1xf32> to vector<8x272xf32>
    %562 = arith.mulf %560, %561 : vector<8x272xf32>
    %563 = arith.addf %555, %562 : vector<8x272xf32>
    %c0_413 = arith.constant 0 : index
    %c5_414 = arith.constant 5 : index
    %c0_415 = arith.constant 0 : index
    %564 = vector.load %arg3[%c0_413, %c5_414, %c0_415] : memref<1x8x340xf32, #tpu.memory_space<vmem>>, vector<1x1x272xf32>
    %565 = vector.shape_cast %564 : vector<1x1x272xf32> to vector<1x272xf32>
    %c8_416 = arith.constant 8 : index
    %c0_417 = arith.constant 0 : index
    %c5_418 = arith.constant 5 : index
    %566 = vector.load %arg1[%c8_416, %c0_417, %c5_418] : memref<9x8x8xf32, #tpu.memory_space<vmem>>, vector<1x8x1xf32>
    %567 = vector.shape_cast %566 : vector<1x8x1xf32> to vector<8x1xf32>
    %568 = vector.broadcast %565 : vector<1x272xf32> to vector<8x272xf32>
    %569 = vector.broadcast %567 : vector<8x1xf32> to vector<8x272xf32>
    %570 = arith.mulf %568, %569 : vector<8x272xf32>
    %571 = arith.addf %563, %570 : vector<8x272xf32>
    %c0_419 = arith.constant 0 : index
    %c6_420 = arith.constant 6 : index
    %c0_421 = arith.constant 0 : index
    %572 = vector.load %arg3[%c0_419, %c6_420, %c0_421] : memref<1x8x340xf32, #tpu.memory_space<vmem>>, vector<1x1x272xf32>
    %573 = vector.shape_cast %572 : vector<1x1x272xf32> to vector<1x272xf32>
    %c8_422 = arith.constant 8 : index
    %c0_423 = arith.constant 0 : index
    %c6_424 = arith.constant 6 : index
    %574 = vector.load %arg1[%c8_422, %c0_423, %c6_424] : memref<9x8x8xf32, #tpu.memory_space<vmem>>, vector<1x8x1xf32>
    %575 = vector.shape_cast %574 : vector<1x8x1xf32> to vector<8x1xf32>
    %576 = vector.broadcast %573 : vector<1x272xf32> to vector<8x272xf32>
    %577 = vector.broadcast %575 : vector<8x1xf32> to vector<8x272xf32>
    %578 = arith.mulf %576, %577 : vector<8x272xf32>
    %579 = arith.addf %571, %578 : vector<8x272xf32>
    %c0_425 = arith.constant 0 : index
    %c7_426 = arith.constant 7 : index
    %c0_427 = arith.constant 0 : index
    %580 = vector.load %arg3[%c0_425, %c7_426, %c0_427] : memref<1x8x340xf32, #tpu.memory_space<vmem>>, vector<1x1x272xf32>
    %581 = vector.shape_cast %580 : vector<1x1x272xf32> to vector<1x272xf32>
    %c8_428 = arith.constant 8 : index
    %c0_429 = arith.constant 0 : index
    %c7_430 = arith.constant 7 : index
    %582 = vector.load %arg1[%c8_428, %c0_429, %c7_430] : memref<9x8x8xf32, #tpu.memory_space<vmem>>, vector<1x8x1xf32>
    %583 = vector.shape_cast %582 : vector<1x8x1xf32> to vector<8x1xf32>
    %584 = vector.broadcast %581 : vector<1x272xf32> to vector<8x272xf32>
    %585 = vector.broadcast %583 : vector<8x1xf32> to vector<8x272xf32>
    %586 = arith.mulf %584, %585 : vector<8x272xf32>
    %587 = arith.addf %579, %586 : vector<8x272xf32>
    %588 = vector.broadcast %0 : vector<8x1xf32> to vector<8x272xf32>
    %589 = arith.addf %587, %588 : vector<8x272xf32>
    %c0_431 = arith.constant 0 : index
    %c24 = arith.constant 24 : index
    %c0_432 = arith.constant 0 : index
    %590 = vector.load %arg4[%c0_431, %c24, %c0_432] : memref<1x32x272xf32, #tpu.memory_space<vmem>>, vector<1x8x272xf32>
    %591 = vector.shape_cast %590 : vector<1x8x272xf32> to vector<8x272xf32>
    %592 = vector.shape_cast %589 : vector<8x272xf32> to vector<1x8x272xf32>
    tpu.vector_store %arg4[%c0_431, %c24, %c0_432], %592 {strides = array<i32>} : memref<1x32x272xf32, #tpu.memory_space<vmem>>, vector<1x8x272xf32>,
    return
  }
  func.func @transform_0(%arg0: i32) -> (i32, i32, i32) {
    %c0_i32 = arith.constant 0 : i32
    %c0_i32_0 = arith.constant 0 : i32
    %c0_i32_1 = arith.constant 0 : i32
    %c0_i32_2 = arith.constant 0 : i32
    return %c0_i32, %c0_i32_0, %c0_i32_1 : i32, i32, i32
  }
  func.func @transform_1(%arg0: i32) -> (i32, i32) {
    %c0_i32 = arith.constant 0 : i32
    %c0_i32_0 = arith.constant 0 : i32
    %c0_i32_1 = arith.constant 0 : i32
    return %c0_i32, %c0_i32_0 : i32, i32
  }
  func.func @transform_2(%arg0: i32) -> (i32, i32, i32) {
    %c0_i32 = arith.constant 0 : i32
    %c0_i32_0 = arith.constant 0 : i32
    %c0_i32_1 = arith.constant 0 : i32
    return %arg0, %c0_i32, %c0_i32_0 : i32, i32, i32
  }
  func.func @transform_3(%arg0: i32) -> (i32, i32, i32) {
    %c0_i32 = arith.constant 0 : i32
    %c0_i32_0 = arith.constant 0 : i32
    %c0_i32_1 = arith.constant 0 : i32
    return %arg0, %c0_i32, %c0_i32_0 : i32, i32, i32
  }
}

</mosaic_0001>

<llo_original>
// kernel: tpu_custom_call.1
$region0: #{tpu_custom_call.1}
  #allocation0 [shape = 'u32[]', space=smem, size = 0x4, offset = 0x4, fixed_abs, tag = 'smem constant byte address 0x4 - core index']
  #allocation1 [shape = 'u32[72,128]{1,0:T(1,128)}', space=vmem, size = 0x9000, scoped, tag = 'internal scratch']
  %s0 = inlined_call_operand.vmem [shape: f32[9,8,8], index: 0, kind: input, shape index: {}]
  %s1 = inlined_call_operand.vmem [shape: f32[8,1], index: 1, kind: input, shape index: {}]
  %s2 = inlined_call_operand.vmem [shape: f32[2,8,340], index: 2, kind: input, shape index: {}]
  %s3 = inlined_call_operand.hbm [shape: f32[2,32,272], index: 3, kind: output, shape index: {}]
  %s4 = sld [smem:[#allocation0]]
  $region45: #{tpu_custom_call.1} parent=0
    _
  %s6 = ssub.s32 1, %s4
  %s7 = scalar_select 0, %s6, %s4
  $region1: #{tpu_custom_call.1} parent=0
    #allocation2 [shape = 'u8[98304]{0}', space=vmem, size = 0x18000, scoped, tag = 'output window, operand 0']
    #allocation3 [shape = 's32[2]{0}', space=sflag, size = 0x8, scoped, tag = 'scoped memory for tpu_custom_call.1']
    %8 = vsyncpa [#allocation3], 0
    %s9 = scalar_lea.sflag [#allocation3], 1
    %10 = vsyncpa %s9, 0
    loop: start=0, step=1, limit=4
    $region2: #{tpu_custom_call.1} parent=1 // loop_pre_header
      _
    $region3: #{tpu_custom_call.1} parent=1 // loop_header
      %s12 = sphi 0, %s16
      %p13 = scmp.ge.s32.totalorder %s12, 4
      %s20 = sphi 0, %s20
      %s22 = sphi 0, %s20
      %s23 = sphi 0, %s22
      %s37 = sphi 0, %s23
      %s41 = sphi 0, %s41
      %s43 = sphi 0, %s41
      %s44 = sphi 0, %s43
      %s58 = sphi 0, %s44
      %s64 = sphi 0, %s66
      %s67 = sphi 0, %s64
      %s68 = sphi 0, %s67
      %s84 = sphi 0, %s68
      %s90 = sphi 0, %s92
      %s93 = sphi 0, %s90
      %s94 = sphi 0, %s93
      %s110 = sphi 0, %s94
    $region4: #{tpu_custom_call.1} parent=1 // loop_header_branch
      %15 = sbr.rel (%p13) target = $region8
    $region5: #{tpu_custom_call.1} parent=1 // loop_body
      %s17 = ssub.s32 %s12, 1
      %s18 = ssub.s32 %s12, 2
      %s19 = sadd.s32 %s12, 1
      %s21 = sadd.s32 %s20, 1
      %p24 = scmp.eq.s32.totalorder %s12, 1
      %p25 = scmp.ne.s32.totalorder %s20, %s22
      %p26 = scmp.eq.s32.totalorder %s12, 0
      %p27 = por %p25, %p26
      %p28 = scmp.ne.s32.totalorder %s20, %s22
      %p29 = scmp.eq.s32.totalorder %s17, 1
      %p30 = por %p28, %p29
      %p31 = scmp.ne.s32.totalorder %s22, %s23
      %p32 = scmp.eq.s32.totalorder %s17, 0
      %p33 = por %p31, %p32
      %p34 = scmp.ne.s32.totalorder %s22, %s23
      %p35 = scmp.eq.s32.totalorder %s18, 1
      %p36 = por %p34, %p35
      %p38 = scmp.ne.s32.totalorder %s23, %s37
      %p39 = scmp.eq.s32.totalorder %s18, 0
      %p40 = por %p38, %p39
      %s42 = sadd.s32 %s41, 1
      %p45 = scmp.eq.s32.totalorder %s12, 1
      %p46 = scmp.ne.s32.totalorder %s41, %s43
      %p47 = scmp.eq.s32.totalorder %s12, 0
      %p48 = por %p46, %p47
      %p49 = scmp.ne.s32.totalorder %s41, %s43
      %p50 = scmp.eq.s32.totalorder %s17, 1
      %p51 = por %p49, %p50
      %p52 = scmp.ne.s32.totalorder %s43, %s44
      %p53 = scmp.eq.s32.totalorder %s17, 0
      %p54 = por %p52, %p53
      %p55 = scmp.ne.s32.totalorder %s43, %s44
      %p56 = scmp.eq.s32.totalorder %s18, 1
      %p57 = por %p55, %p56
      %p59 = scmp.ne.s32.totalorder %s44, %s58
      %p60 = scmp.eq.s32.totalorder %s18, 0
      %p61 = por %p59, %p60
      %s62 = ssub.s32 %s12, %s19
      %p63 = scmp.eq.s32.totalorder %s62, 0
      %s65 = sadd.s32 %s64, 1
      %s66 = scalar_select %p63, %s64, %s65
      %p69 = pneg %p63
      %p70 = scmp.eq.s32.totalorder %s12, 1
      %p71 = por %p69, %p70
      %p72 = scmp.ne.s32.totalorder %s64, %s67
      %p73 = scmp.eq.s32.totalorder %s12, 0
      %p74 = por %p72, %p73
      %p75 = scmp.ne.s32.totalorder %s64, %s67
      %p76 = scmp.eq.s32.totalorder %s17, 1
      %p77 = por %p75, %p76
      %p78 = scmp.ne.s32.totalorder %s67, %s68
      %p79 = scmp.eq.s32.totalorder %s17, 0
      %p80 = por %p78, %p79
      %p81 = scmp.ne.s32.totalorder %s67, %s68
      %p82 = scmp.eq.s32.totalorder %s18, 1
      %p83 = por %p81, %p82
      %p85 = scmp.ne.s32.totalorder %s68, %s84
      %p86 = scmp.eq.s32.totalorder %s18, 0
      %p87 = por %p85, %p86
      %s88 = ssub.s32 %s12, %s19
      %p89 = scmp.eq.s32.totalorder %s88, 0
      %s91 = sadd.s32 %s90, 1
      %s92 = scalar_select %p89, %s90, %s91
      %p95 = pneg %p89
      %p96 = scmp.eq.s32.totalorder %s12, 1
      %p97 = por %p95, %p96
      %p98 = scmp.ne.s32.totalorder %s90, %s93
      %p99 = scmp.eq.s32.totalorder %s12, 0
      %p100 = por %p98, %p99
      %p101 = scmp.ne.s32.totalorder %s90, %s93
      %p102 = scmp.eq.s32.totalorder %s17, 1
      %p103 = por %p101, %p102
      %p104 = scmp.ne.s32.totalorder %s93, %s94
      %p105 = scmp.eq.s32.totalorder %s17, 0
      %p106 = por %p104, %p105
      %p107 = scmp.ne.s32.totalorder %s93, %s94
      %p108 = scmp.eq.s32.totalorder %s18, 1
      %p109 = por %p107, %p108
      %p111 = scmp.ne.s32.totalorder %s94, %s110
      %p112 = scmp.eq.s32.totalorder %s18, 0
      %p113 = por %p111, %p112
      %p114 = scmp.le.s32.totalorder 1, %s12
      %p115 = scmp.lt.s32.totalorder %s12, 3
      %p116 = pnand %p114, %p115
      %p117 = pneg %p116
      // Predicated region
      $region9: #{tpu_custom_call.1} parent=5 // pred_check
        _
      $region10: #{tpu_custom_call.1} parent=5 // pred_check_branch
        %119 = sbr.rel (%p116) target = $region12
      $region11: #{tpu_custom_call.1} parent=5 // pred_region
        %s120 = ssub.s32 %s12, 1
        // Predicated region
        $region13: #{tpu_custom_call.1} parent=11 // pred_check
          %p121 = pneg %p33
        $region14: #{tpu_custom_call.1} parent=11 // pred_check_branch
          %123 = sbr.rel (%p121) target = $region16
        $region15: #{tpu_custom_call.1} parent=11 // pred_region
          _
        $region16: #{tpu_custom_call.1} parent=11 // pred_fallthru
          _
        // Predicated region
        $region17: #{tpu_custom_call.1} parent=11 // pred_check
          %p124 = pneg %p54
        $region18: #{tpu_custom_call.1} parent=11 // pred_check_branch
          %126 = sbr.rel (%p124) target = $region20
        $region19: #{tpu_custom_call.1} parent=11 // pred_region
          _
        $region20: #{tpu_custom_call.1} parent=11 // pred_fallthru
          _
      $region12: #{tpu_custom_call.1} parent=5 // pred_fallthru
        _
      %p127 = scmp.lt.s32.totalorder %s12, 2
      // Predicated region
      $region21: #{tpu_custom_call.1} parent=5 // pred_check
        %p128 = pneg %p127
      $region22: #{tpu_custom_call.1} parent=5 // pred_check_branch
        %130 = sbr.rel (%p128) target = $region24
      $region23: #{tpu_custom_call.1} parent=5 // pred_region
        // Predicated region
        $region25: #{tpu_custom_call.1} parent=23 // pred_check
          %p131 = pneg %p74
        $region26: #{tpu_custom_call.1} parent=23 // pred_check_branch
          %133 = sbr.rel (%p131) target = $region28
        $region27: #{tpu_custom_call.1} parent=23 // pred_region
          %p134 = scmp.lt.s32.totalorder %s12, 1
          %s135 = scalar_select %p134, %s12, 1
          %s136 = smul.addr %s135, 3
          %s137 = smul.addr %s136, 8
          %s138 = scalar_lea.vmem %s2, %s137
        $region28: #{tpu_custom_call.1} parent=23 // pred_fallthru
          _
      $region24: #{tpu_custom_call.1} parent=5 // pred_fallthru
        _
      %p139 = scmp.le.s32.totalorder 1, %s12
      %p140 = scmp.lt.s32.totalorder %s12, 3
      %p141 = pnand %p139, %p140
      %p142 = pneg %p141
      // Predicated region
      $region29: #{tpu_custom_call.1} parent=5 // pred_check
        _
      $region30: #{tpu_custom_call.1} parent=5 // pred_check_branch
        %144 = sbr.rel (%p141) target = $region32
      $region31: #{tpu_custom_call.1} parent=5 // pred_region
        %s145 = ssub.s32 %s12, 1
        %p146 = pneg %p33
        %p147 = pneg %p30
        %p148 = pneg %p54
        %p149 = pneg %p51
        %p150 = scmp.lt.s32.totalorder %s17, 1
        %s151 = scalar_select %p150, %s17, 1
        %s152 = smul.addr %s151, 3
        %s153 = smul.addr %s152, 8
        %s154 = scalar_lea.vmem %s2, %s153
        %p155 = pneg %p80
        %p156 = pneg %p77
        %p157 = pneg %p106
        %p158 = pneg %p103
        %s159 = sand.u32 %s93, 1
        %s160 = scalar_lea.sflag [#allocation3], %s159
        %s161 = sand.u32 %s93, 1
        %s162 = smul.addr %s161, 96
        %s163 = scalar_lea.vmem [#allocation2], %s162
        %p164 = scmp.lt.s32.totalorder %s17, 1
        %s165 = scalar_select %p164, %s17, 1
        %s166 = smul.addr %s165, 3
        %s167 = smul.addr %s166, 8
        %s168 = scalar_lea.vmem %s2, %s167
        %v169 = vld [vmem:[%s1] sm:$0xff]
        %v170 = vld [vmem:[%s168] ss:$8 sm:$0x7]
        %s171 = scalar_lea.vmem %s0, 32
        %v172 = vld [vmem:[%s171] sm:$0xff]
        %v174 = vperm.slane %v170, 0
        %v175 = vperm.slane %v170, 1
        %v176 = vperm.slane %v170, 2
        %181 = vset.pattern.permute.xlu0 0
        %182 = vperm.xlu0 %181, %v172
        %v183 = vpop.permute.xlu0 %182
        %v185 = vmul.f32 %v174, %v183
        %v186 = vmul.f32 %v175, %v183
        %v187 = vmul.f32 %v176, %v183
        %s188 = scalar_lea.vmem %s168, 1
        %v189 = vld [vmem:[%s188] ss:$8 sm:$0x7]
        %v191 = vperm.slane %v189, 0
        %v192 = vperm.slane %v189, 1
        %v193 = vperm.slane %v189, 2
        %197 = vset.pattern.permute.xlu0 1
        %198 = vperm.xlu0 %197, %v172
        %v199 = vpop.permute.xlu0 %198
        %v201 = vmul.f32 %v191, %v199
        %v202 = vmul.f32 %v192, %v199
        %v203 = vmul.f32 %v193, %v199
        %v204 = vadd.f32 %v185, %v201
        %v205 = vadd.f32 %v186, %v202
        %v206 = vadd.f32 %v187, %v203
        %s207 = scalar_lea.vmem %s168, 2
        %v208 = vld [vmem:[%s207] ss:$8 sm:$0x7]
        %v210 = vperm.slane %v208, 0
        %v211 = vperm.slane %v208, 1
        %v212 = vperm.slane %v208, 2
        %216 = vset.pattern.permute.xlu0 2
        %217 = vperm.xlu0 %216, %v172
        %v218 = vpop.permute.xlu0 %217
        %v220 = vmul.f32 %v210, %v218
        %v221 = vmul.f32 %v211, %v218
        %v222 = vmul.f32 %v212, %v218
        %v223 = vadd.f32 %v204, %v220
        %v224 = vadd.f32 %v205, %v221
        %v225 = vadd.f32 %v206, %v222
        %s226 = scalar_lea.vmem %s168, 3
        %v227 = vld [vmem:[%s226] ss:$8 sm:$0x7]
        %v229 = vperm.slane %v227, 0
        %v230 = vperm.slane %v227, 1
        %v231 = vperm.slane %v227, 2
        %235 = vset.pattern.permute.xlu0 3
        %236 = vperm.xlu0 %235, %v172
        %v237 = vpop.permute.xlu0 %236
        %v239 = vmul.f32 %v229, %v237
        %v240 = vmul.f32 %v230, %v237
        %v241 = vmul.f32 %v231, %v237
        %v242 = vadd.f32 %v223, %v239
        %v243 = vadd.f32 %v224, %v240
        %v244 = vadd.f32 %v225, %v241
        %s245 = scalar_lea.vmem %s168, 4
        %v246 = vld [vmem:[%s245] ss:$8 sm:$0x7]
        %v248 = vperm.slane %v246, 0
        %v249 = vperm.slane %v246, 1
        %v250 = vperm.slane %v246, 2
        %254 = vset.pattern.permute.xlu0 4
        %255 = vperm.xlu0 %254, %v172
        %v256 = vpop.permute.xlu0 %255
        %v258 = vmul.f32 %v248, %v256
        %v259 = vmul.f32 %v249, %v256
        %v260 = vmul.f32 %v250, %v256
        %v261 = vadd.f32 %v242, %v258
        %v262 = vadd.f32 %v243, %v259
        %v263 = vadd.f32 %v244, %v260
        %s264 = scalar_lea.vmem %s168, 5
        %v265 = vld [vmem:[%s264] ss:$8 sm:$0x7]
        %v267 = vperm.slane %v265, 0
        %v268 = vperm.slane %v265, 1
        %v269 = vperm.slane %v265, 2
        %273 = vset.pattern.permute.xlu0 5
        %274 = vperm.xlu0 %273, %v172
        %v275 = vpop.permute.xlu0 %274
        %v277 = vmul.f32 %v267, %v275
        %v278 = vmul.f32 %v268, %v275
        %v279 = vmul.f32 %v269, %v275
        %v280 = vadd.f32 %v261, %v277
        %v281 = vadd.f32 %v262, %v278
        %v282 = vadd.f32 %v263, %v279
        %s283 = scalar_lea.vmem %s168, 6
        %v284 = vld [vmem:[%s283] ss:$8 sm:$0x7]
        %v286 = vperm.slane %v284, 0
        %v287 = vperm.slane %v284, 1
        %v288 = vperm.slane %v284, 2
        %292 = vset.pattern.permute.xlu0 6
        %293 = vperm.xlu0 %292, %v172
        %v294 = vpop.permute.xlu0 %293
        %v296 = vmul.f32 %v286, %v294
        %v297 = vmul.f32 %v287, %v294
        %v298 = vmul.f32 %v288, %v294
        %v299 = vadd.f32 %v280, %v296
        %v300 = vadd.f32 %v281, %v297
        %v301 = vadd.f32 %v282, %v298
        %s302 = scalar_lea.vmem %s168, 7
        %v303 = vld [vmem:[%s302] ss:$8 sm:$0x7]
        %v305 = vperm.slane %v303, 0
        %v306 = vperm.slane %v303, 1
        %v307 = vperm.slane %v303, 2
        %311 = vset.pattern.permute.xlu0 7
        %312 = vperm.xlu0 %311, %v172
        %v313 = vpop.permute.xlu0 %312
        %v315 = vmul.f32 %v305, %v313
        %v316 = vmul.f32 %v306, %v313
        %v317 = vmul.f32 %v307, %v313
        %v318 = vadd.f32 %v299, %v315
        %v319 = vadd.f32 %v300, %v316
        %v320 = vadd.f32 %v301, %v317
        %322 = vset.pattern.permute.xlu0 0
        %323 = vperm.xlu0 %322, %v169
        %v324 = vpop.permute.xlu0 %323
        %v326 = vadd.f32 %v318, %v324
        %v327 = vadd.f32 %v319, %v324
        %v328 = vadd.f32 %v320, %v324
        %329 = vst [vmem:[%s163] sm:$0xff] %v326
        %330 = vst [vmem:[%s163 + $0x8] sm:$0xff] %v327
        %vm331 = vcmask 130048
        %332 = vst.msk [vmem:[%s163 + $0x10] sm:$0xff] %vm331, %v328
        %v333 = vld [vmem:[%s168] ss:$8 sm:$0x7]
        %s334 = scalar_lea.vmem %s0, 24
        %v335 = vld [vmem:[%s334] sm:$0xff]
        %v337 = vperm.slane %v333, 0
        %v338 = vperm.slane %v333, 1
        %v339 = vperm.slane %v333, 2
        %344 = vset.pattern.permute.xlu0 0
        %345 = vperm.xlu0 %344, %v335
        %v346 = vpop.permute.xlu0 %345
        %v348 = vmul.f32 %v337, %v346
        %v349 = vmul.f32 %v338, %v346
        %v350 = vmul.f32 %v339, %v346
        %v351 = vld [vmem:[%s188] ss:$8 sm:$0x7]
        %v353 = vperm.slane %v351, 0
        %v354 = vperm.slane %v351, 1
        %v355 = vperm.slane %v351, 2
        %359 = vset.pattern.permute.xlu0 1
        %360 = vperm.xlu0 %359, %v335
        %v361 = vpop.permute.xlu0 %360
        %v363 = vmul.f32 %v353, %v361
        %v364 = vmul.f32 %v354, %v361
        %v365 = vmul.f32 %v355, %v361
        %v366 = vadd.f32 %v348, %v363
        %v367 = vadd.f32 %v349, %v364
        %v368 = vadd.f32 %v350, %v365
        %v369 = vld [vmem:[%s207] ss:$8 sm:$0x7]
        %v371 = vperm.slane %v369, 0
        %v372 = vperm.slane %v369, 1
        %v373 = vperm.slane %v369, 2
        %377 = vset.pattern.permute.xlu0 2
        %378 = vperm.xlu0 %377, %v335
        %v379 = vpop.permute.xlu0 %378
        %v381 = vmul.f32 %v371, %v379
        %v382 = vmul.f32 %v372, %v379
        %v383 = vmul.f32 %v373, %v379
        %v384 = vadd.f32 %v366, %v381
        %v385 = vadd.f32 %v367, %v382
        %v386 = vadd.f32 %v368, %v383
        %v387 = vld [vmem:[%s226] ss:$8 sm:$0x7]
        %v389 = vperm.slane %v387, 0
        %v390 = vperm.slane %v387, 1
        %v391 = vperm.slane %v387, 2
        %395 = vset.pattern.permute.xlu0 3
        %396 = vperm.xlu0 %395, %v335
        %v397 = vpop.permute.xlu0 %396
        %v399 = vmul.f32 %v389, %v397
        %v400 = vmul.f32 %v390, %v397
        %v401 = vmul.f32 %v391, %v397
        %v402 = vadd.f32 %v384, %v399
        %v403 = vadd.f32 %v385, %v400
        %v404 = vadd.f32 %v386, %v401
        %v405 = vld [vmem:[%s245] ss:$8 sm:$0x7]
        %v407 = vperm.slane %v405, 0
        %v408 = vperm.slane %v405, 1
        %v409 = vperm.slane %v405, 2
        %413 = vset.pattern.permute.xlu0 4
        %414 = vperm.xlu0 %413, %v335
        %v415 = vpop.permute.xlu0 %414
        %v417 = vmul.f32 %v407, %v415
        %v418 = vmul.f32 %v408, %v415
        %v419 = vmul.f32 %v409, %v415
        %v420 = vadd.f32 %v402, %v417
        %v421 = vadd.f32 %v403, %v418
        %v422 = vadd.f32 %v404, %v419
        %v423 = vld [vmem:[%s264] ss:$8 sm:$0x7]
        %v425 = vperm.slane %v423, 0
        %v426 = vperm.slane %v423, 1
        %v427 = vperm.slane %v423, 2
        %431 = vset.pattern.permute.xlu0 5
        %432 = vperm.xlu0 %431, %v335
        %v433 = vpop.permute.xlu0 %432
        %v435 = vmul.f32 %v425, %v433
        %v436 = vmul.f32 %v426, %v433
        %v437 = vmul.f32 %v427, %v433
        %v438 = vadd.f32 %v420, %v435
        %v439 = vadd.f32 %v421, %v436
        %v440 = vadd.f32 %v422, %v437
        %v441 = vld [vmem:[%s283] ss:$8 sm:$0x7]
        %v443 = vperm.slane %v441, 0
        %v444 = vperm.slane %v441, 1
        %v445 = vperm.slane %v441, 2
        %449 = vset.pattern.permute.xlu0 6
        %450 = vperm.xlu0 %449, %v335
        %v451 = vpop.permute.xlu0 %450
        %v453 = vmul.f32 %v443, %v451
        %v454 = vmul.f32 %v444, %v451
        %v455 = vmul.f32 %v445, %v451
        %v456 = vadd.f32 %v438, %v453
        %v457 = vadd.f32 %v439, %v454
        %v458 = vadd.f32 %v440, %v455
        %v459 = vld [vmem:[%s302] ss:$8 sm:$0x7]
        %v461 = vperm.slane %v459, 0
        %v462 = vperm.slane %v459, 1
        %v463 = vperm.slane %v459, 2
        %467 = vset.pattern.permute.xlu0 7
        %468 = vperm.xlu0 %467, %v335
        %v469 = vpop.permute.xlu0 %468
        %v471 = vmul.f32 %v461, %v469
        %v472 = vmul.f32 %v462, %v469
        %v473 = vmul.f32 %v463, %v469
        %v474 = vadd.f32 %v456, %v471
        %v475 = vadd.f32 %v457, %v472
        %v476 = vadd.f32 %v458, %v473
        %s477 = scalar_lea.vmem %s0, 40
        %v478 = vld [vmem:[%s477] sm:$0xff]
        %480 = vset.pattern.permute.xlu0 0
        %481 = vperm.xlu0 %480, %v478
        %v482 = vpop.permute.xlu0 %481
        %v484 = vmul.f32 %v337, %v482
        %v485 = vmul.f32 %v338, %v482
        %v486 = vmul.f32 %v339, %v482
        %490 = vrot.lane.b32.xlu0 %v484, 1
        %v491 = vpop.permute.xlu0 %490
        %492 = vrot.lane.b32.xlu0 %v485, 1
        %v493 = vpop.permute.xlu0 %492
        %494 = vrot.lane.b32.xlu0 %v486, 1
        %v495 = vpop.permute.xlu0 %494
        %vm496 = vcmask 7168
        %v497 = vsel %vm496, %v491, %v493
        %v498 = vsel %vm496, %v493, %v495
        %v502 = vadd.f32 %v474, %v491
        %v503 = vadd.f32 %v475, %v497
        %v504 = vadd.f32 %v476, %v498
        %505 = vset.pattern.permute.xlu0 1
        %506 = vperm.xlu0 %505, %v478
        %v507 = vpop.permute.xlu0 %506
        %v509 = vmul.f32 %v353, %v507
        %v510 = vmul.f32 %v354, %v507
        %v511 = vmul.f32 %v355, %v507
        %515 = vrot.lane.b32.xlu0 %v509, 1
        %v516 = vpop.permute.xlu0 %515
        %517 = vrot.lane.b32.xlu0 %v510, 1
        %v518 = vpop.permute.xlu0 %517
        %519 = vrot.lane.b32.xlu0 %v511, 1
        %v520 = vpop.permute.xlu0 %519
        %v521 = vsel %vm496, %v516, %v518
        %v522 = vsel %vm496, %v518, %v520
        %v526 = vadd.f32 %v502, %v516
        %v527 = vadd.f32 %v503, %v521
        %v528 = vadd.f32 %v504, %v522
        %529 = vset.pattern.permute.xlu0 2
        %530 = vperm.xlu0 %529, %v478
        %v531 = vpop.permute.xlu0 %530
        %v533 = vmul.f32 %v371, %v531
        %v534 = vmul.f32 %v372, %v531
        %v535 = vmul.f32 %v373, %v531
        %539 = vrot.lane.b32.xlu0 %v533, 1
        %v540 = vpop.permute.xlu0 %539
        %541 = vrot.lane.b32.xlu0 %v534, 1
        %v542 = vpop.permute.xlu0 %541
        %543 = vrot.lane.b32.xlu0 %v535, 1
        %v544 = vpop.permute.xlu0 %543
        %v545 = vsel %vm496, %v540, %v542
        %v546 = vsel %vm496, %v542, %v544
        %v550 = vadd.f32 %v526, %v540
        %v551 = vadd.f32 %v527, %v545
        %v552 = vadd.f32 %v528, %v546
        %553 = vset.pattern.permute.xlu0 3
        %554 = vperm.xlu0 %553, %v478
        %v555 = vpop.permute.xlu0 %554
        %v557 = vmul.f32 %v389, %v555
        %v558 = vmul.f32 %v390, %v555
        %v559 = vmul.f32 %v391, %v555
        %563 = vrot.lane.b32.xlu0 %v557, 1
        %v564 = vpop.permute.xlu0 %563
        %565 = vrot.lane.b32.xlu0 %v558, 1
        %v566 = vpop.permute.xlu0 %565
        %567 = vrot.lane.b32.xlu0 %v559, 1
        %v568 = vpop.permute.xlu0 %567
        %v569 = vsel %vm496, %v564, %v566
        %v570 = vsel %vm496, %v566, %v568
        %v574 = vadd.f32 %v550, %v564
        %v575 = vadd.f32 %v551, %v569
        %v576 = vadd.f32 %v552, %v570
        %577 = vset.pattern.permute.xlu0 4
        %578 = vperm.xlu0 %577, %v478
        %v579 = vpop.permute.xlu0 %578
        %v581 = vmul.f32 %v407, %v579
        %v582 = vmul.f32 %v408, %v579
        %v583 = vmul.f32 %v409, %v579
        %587 = vrot.lane.b32.xlu0 %v581, 1
        %v588 = vpop.permute.xlu0 %587
        %589 = vrot.lane.b32.xlu0 %v582, 1
        %v590 = vpop.permute.xlu0 %589
        %591 = vrot.lane.b32.xlu0 %v583, 1
        %v592 = vpop.permute.xlu0 %591
        %v593 = vsel %vm496, %v588, %v590
        %v594 = vsel %vm496, %v590, %v592
        %v598 = vadd.f32 %v574, %v588
        %v599 = vadd.f32 %v575, %v593
        %v600 = vadd.f32 %v576, %v594
        %601 = vset.pattern.permute.xlu0 5
        %602 = vperm.xlu0 %601, %v478
        %v603 = vpop.permute.xlu0 %602
        %v605 = vmul.f32 %v425, %v603
        %v606 = vmul.f32 %v426, %v603
        %v607 = vmul.f32 %v427, %v603
        %611 = vrot.lane.b32.xlu0 %v605, 1
        %v612 = vpop.permute.xlu0 %611
        %613 = vrot.lane.b32.xlu0 %v606, 1
        %v614 = vpop.permute.xlu0 %613
        %615 = vrot.lane.b32.xlu0 %v607, 1
        %v616 = vpop.permute.xlu0 %615
        %v617 = vsel %vm496, %v612, %v614
        %v618 = vsel %vm496, %v614, %v616
        %v622 = vadd.f32 %v598, %v612
        %v623 = vadd.f32 %v599, %v617
        %v624 = vadd.f32 %v600, %v618
        %625 = vset.pattern.permute.xlu0 6
        %626 = vperm.xlu0 %625, %v478
        %v627 = vpop.permute.xlu0 %626
        %v629 = vmul.f32 %v443, %v627
        %v630 = vmul.f32 %v444, %v627
        %v631 = vmul.f32 %v445, %v627
        %635 = vrot.lane.b32.xlu0 %v629, 1
        %v636 = vpop.permute.xlu0 %635
        %637 = vrot.lane.b32.xlu0 %v630, 1
        %v638 = vpop.permute.xlu0 %637
        %639 = vrot.lane.b32.xlu0 %v631, 1
        %v640 = vpop.permute.xlu0 %639
        %v641 = vsel %vm496, %v636, %v638
        %v642 = vsel %vm496, %v638, %v640
        %v646 = vadd.f32 %v622, %v636
        %v647 = vadd.f32 %v623, %v641
        %v648 = vadd.f32 %v624, %v642
        %649 = vset.pattern.permute.xlu0 7
        %650 = vperm.xlu0 %649, %v478
        %v651 = vpop.permute.xlu0 %650
        %v653 = vmul.f32 %v461, %v651
        %v654 = vmul.f32 %v462, %v651
        %v655 = vmul.f32 %v463, %v651
        %659 = vrot.lane.b32.xlu0 %v653, 1
        %v660 = vpop.permute.xlu0 %659
        %661 = vrot.lane.b32.xlu0 %v654, 1
        %v662 = vpop.permute.xlu0 %661
        %663 = vrot.lane.b32.xlu0 %v655, 1
        %v664 = vpop.permute.xlu0 %663
        %v665 = vsel %vm496, %v660, %v662
        %v666 = vsel %vm496, %v662, %v664
        %v670 = vadd.f32 %v646, %v660
        %v671 = vadd.f32 %v647, %v665
        %v672 = vadd.f32 %v648, %v666
        %v673 = vadd.f32 %v670, %v324
        %v674 = vadd.f32 %v671, %v324
        %v675 = vadd.f32 %v672, %v324
        %679 = vrot.lane.b32.xlu0 %v673, 127
        %v680 = vpop.permute.xlu0 %679
        %681 = vrot.lane.b32.xlu0 %v674, 127
        %v682 = vpop.permute.xlu0 %681
        %683 = vrot.lane.b32.xlu0 %v675, 127
        %v684 = vpop.permute.xlu0 %683
        %vm685 = vcmask 1039360
        %v686 = vsel %vm685, %v680, %v682
        %v687 = vsel %vm685, %v682, %v684
        %691 = vst [vmem:[%s163 + $0x18] sm:$0xff] %v686
        %692 = vst [vmem:[%s163 + $0x20] sm:$0xff] %v687
        %693 = vst.msk [vmem:[%s163 + $0x28] sm:$0xff] %vm331, %v684
        %v694 = vld [vmem:[%s168] ss:$8 sm:$0x7]
        %s695 = scalar_lea.vmem %s0, 8
        %v696 = vld [vmem:[%s695] sm:$0xff]
        %v698 = vperm.slane %v694, 0
        %v699 = vperm.slane %v694, 1
        %v700 = vperm.slane %v694, 2
        %705 = vset.pattern.permute.xlu0 0
        %706 = vperm.xlu0 %705, %v696
        %v707 = vpop.permute.xlu0 %706
        %v709 = vmul.f32 %v698, %v707
        %v710 = vmul.f32 %v699, %v707
        %v711 = vmul.f32 %v700, %v707
        %v712 = vld [vmem:[%s188] ss:$8 sm:$0x7]
        %v714 = vperm.slane %v712, 0
        %v715 = vperm.slane %v712, 1
        %v716 = vperm.slane %v712, 2
        %720 = vset.pattern.permute.xlu0 1
        %721 = vperm.xlu0 %720, %v696
        %v722 = vpop.permute.xlu0 %721
        %v724 = vmul.f32 %v714, %v722
        %v725 = vmul.f32 %v715, %v722
        %v726 = vmul.f32 %v716, %v722
        %v727 = vadd.f32 %v709, %v724
        %v728 = vadd.f32 %v710, %v725
        %v729 = vadd.f32 %v711, %v726
        %v730 = vld [vmem:[%s207] ss:$8 sm:$0x7]
        %v732 = vperm.slane %v730, 0
        %v733 = vperm.slane %v730, 1
        %v734 = vperm.slane %v730, 2
        %738 = vset.pattern.permute.xlu0 2
        %739 = vperm.xlu0 %738, %v696
        %v740 = vpop.permute.xlu0 %739
        %v742 = vmul.f32 %v732, %v740
        %v743 = vmul.f32 %v733, %v740
        %v744 = vmul.f32 %v734, %v740
        %v745 = vadd.f32 %v727, %v742
        %v746 = vadd.f32 %v728, %v743
        %v747 = vadd.f32 %v729, %v744
        %v748 = vld [vmem:[%s226] ss:$8 sm:$0x7]
        %v750 = vperm.slane %v748, 0
        %v751 = vperm.slane %v748, 1
        %v752 = vperm.slane %v748, 2
        %756 = vset.pattern.permute.xlu0 3
        %757 = vperm.xlu0 %756, %v696
        %v758 = vpop.permute.xlu0 %757
        %v760 = vmul.f32 %v750, %v758
        %v761 = vmul.f32 %v751, %v758
        %v762 = vmul.f32 %v752, %v758
        %v763 = vadd.f32 %v745, %v760
        %v764 = vadd.f32 %v746, %v761
        %v765 = vadd.f32 %v747, %v762
        %v766 = vld [vmem:[%s245] ss:$8 sm:$0x7]
        %v768 = vperm.slane %v766, 0
        %v769 = vperm.slane %v766, 1
        %v770 = vperm.slane %v766, 2
        %774 = vset.pattern.permute.xlu0 4
        %775 = vperm.xlu0 %774, %v696
        %v776 = vpop.permute.xlu0 %775
        %v778 = vmul.f32 %v768, %v776
        %v779 = vmul.f32 %v769, %v776
        %v780 = vmul.f32 %v770, %v776
        %v781 = vadd.f32 %v763, %v778
        %v782 = vadd.f32 %v764, %v779
        %v783 = vadd.f32 %v765, %v780
        %v784 = vld [vmem:[%s264] ss:$8 sm:$0x7]
        %v786 = vperm.slane %v784, 0
        %v787 = vperm.slane %v784, 1
        %v788 = vperm.slane %v784, 2
        %792 = vset.pattern.permute.xlu0 5
        %793 = vperm.xlu0 %792, %v696
        %v794 = vpop.permute.xlu0 %793
        %v796 = vmul.f32 %v786, %v794
        %v797 = vmul.f32 %v787, %v794
        %v798 = vmul.f32 %v788, %v794
        %v799 = vadd.f32 %v781, %v796
        %v800 = vadd.f32 %v782, %v797
        %v801 = vadd.f32 %v783, %v798
        %v802 = vld [vmem:[%s283] ss:$8 sm:$0x7]
        %v804 = vperm.slane %v802, 0
        %v805 = vperm.slane %v802, 1
        %v806 = vperm.slane %v802, 2
        %810 = vset.pattern.permute.xlu0 6
        %811 = vperm.xlu0 %810, %v696
        %v812 = vpop.permute.xlu0 %811
        %v814 = vmul.f32 %v804, %v812
        %v815 = vmul.f32 %v805, %v812
        %v816 = vmul.f32 %v806, %v812
        %v817 = vadd.f32 %v799, %v814
        %v818 = vadd.f32 %v800, %v815
        %v819 = vadd.f32 %v801, %v816
        %v820 = vld [vmem:[%s302] ss:$8 sm:$0x7]
        %v822 = vperm.slane %v820, 0
        %v823 = vperm.slane %v820, 1
        %v824 = vperm.slane %v820, 2
        %828 = vset.pattern.permute.xlu0 7
        %829 = vperm.xlu0 %828, %v696
        %v830 = vpop.permute.xlu0 %829
        %v832 = vmul.f32 %v822, %v830
        %v833 = vmul.f32 %v823, %v830
        %v834 = vmul.f32 %v824, %v830
        %v835 = vadd.f32 %v817, %v832
        %v836 = vadd.f32 %v818, %v833
        %v837 = vadd.f32 %v819, %v834
        %s838 = scalar_lea.vmem %s0, 56
        %v839 = vld [vmem:[%s838] sm:$0xff]
        %841 = vset.pattern.permute.xlu0 0
        %842 = vperm.xlu0 %841, %v839
        %v843 = vpop.permute.xlu0 %842
        %v845 = vmul.f32 %v698, %v843
        %v846 = vmul.f32 %v699, %v843
        %v847 = vmul.f32 %v700, %v843
        %851 = vrot.lane.b32.xlu0 %v845, 34
        %v852 = vpop.permute.xlu0 %851
        %853 = vrot.lane.b32.xlu0 %v846, 34
        %v854 = vpop.permute.xlu0 %853
        %855 = vrot.lane.b32.xlu0 %v847, 34
        %v856 = vpop.permute.xlu0 %855
        %vm857 = vcmask 277504
        %v858 = vsel %vm857, %v852, %v854
        %v859 = vsel %vm857, %v854, %v856
        %v863 = vadd.f32 %v835, %v852
        %v864 = vadd.f32 %v836, %v858
        %v865 = vadd.f32 %v837, %v859
        %866 = vset.pattern.permute.xlu0 1
        %867 = vperm.xlu0 %866, %v839
        %v868 = vpop.permute.xlu0 %867
        %v870 = vmul.f32 %v714, %v868
        %v871 = vmul.f32 %v715, %v868
        %v872 = vmul.f32 %v716, %v868
        %876 = vrot.lane.b32.xlu0 %v870, 34
        %v877 = vpop.permute.xlu0 %876
        %878 = vrot.lane.b32.xlu0 %v871, 34
        %v879 = vpop.permute.xlu0 %878
        %880 = vrot.lane.b32.xlu0 %v872, 34
        %v881 = vpop.permute.xlu0 %880
        %v882 = vsel %vm857, %v877, %v879
        %v883 = vsel %vm857, %v879, %v881
        %v887 = vadd.f32 %v863, %v877
        %v888 = vadd.f32 %v864, %v882
        %v889 = vadd.f32 %v865, %v883
        %890 = vset.pattern.permute.xlu0 2
        %891 = vperm.xlu0 %890, %v839
        %v892 = vpop.permute.xlu0 %891
        %v894 = vmul.f32 %v732, %v892
        %v895 = vmul.f32 %v733, %v892
        %v896 = vmul.f32 %v734, %v892
        %900 = vrot.lane.b32.xlu0 %v894, 34
        %v901 = vpop.permute.xlu0 %900
        %902 = vrot.lane.b32.xlu0 %v895, 34
        %v903 = vpop.permute.xlu0 %902
        %904 = vrot.lane.b32.xlu0 %v896, 34
        %v905 = vpop.permute.xlu0 %904
        %v906 = vsel %vm857, %v901, %v903
        %v907 = vsel %vm857, %v903, %v905
        %v911 = vadd.f32 %v887, %v901
        %v912 = vadd.f32 %v888, %v906
        %v913 = vadd.f32 %v889, %v907
        %914 = vset.pattern.permute.xlu0 3
        %915 = vperm.xlu0 %914, %v839
        %v916 = vpop.permute.xlu0 %915
        %v918 = vmul.f32 %v750, %v916
        %v919 = vmul.f32 %v751, %v916
        %v920 = vmul.f32 %v752, %v916
        %924 = vrot.lane.b32.xlu0 %v918, 34
        %v925 = vpop.permute.xlu0 %924
        %926 = vrot.lane.b32.xlu0 %v919, 34
        %v927 = vpop.permute.xlu0 %926
        %928 = vrot.lane.b32.xlu0 %v920, 34
        %v929 = vpop.permute.xlu0 %928
        %v930 = vsel %vm857, %v925, %v927
        %v931 = vsel %vm857, %v927, %v929
        %v935 = vadd.f32 %v911, %v925
        %v936 = vadd.f32 %v912, %v930
        %v937 = vadd.f32 %v913, %v931
        %938 = vset.pattern.permute.xlu0 4
        %939 = vperm.xlu0 %938, %v839
        %v940 = vpop.permute.xlu0 %939
        %v942 = vmul.f32 %v768, %v940
        %v943 = vmul.f32 %v769, %v940
        %v944 = vmul.f32 %v770, %v940
        %948 = vrot.lane.b32.xlu0 %v942, 34
        %v949 = vpop.permute.xlu0 %948
        %950 = vrot.lane.b32.xlu0 %v943, 34
        %v951 = vpop.permute.xlu0 %950
        %952 = vrot.lane.b32.xlu0 %v944, 34
        %v953 = vpop.permute.xlu0 %952
        %v954 = vsel %vm857, %v949, %v951
        %v955 = vsel %vm857, %v951, %v953
        %v959 = vadd.f32 %v935, %v949
        %v960 = vadd.f32 %v936, %v954
        %v961 = vadd.f32 %v937, %v955
        %962 = vset.pattern.permute.xlu0 5
        %963 = vperm.xlu0 %962, %v839
        %v964 = vpop.permute.xlu0 %963
        %v966 = vmul.f32 %v786, %v964
        %v967 = vmul.f32 %v787, %v964
        %v968 = vmul.f32 %v788, %v964
        %972 = vrot.lane.b32.xlu0 %v966, 34
        %v973 = vpop.permute.xlu0 %972
        %974 = vrot.lane.b32.xlu0 %v967, 34
        %v975 = vpop.permute.xlu0 %974
        %976 = vrot.lane.b32.xlu0 %v968, 34
        %v977 = vpop.permute.xlu0 %976
        %v978 = vsel %vm857, %v973, %v975
        %v979 = vsel %vm857, %v975, %v977
        %v983 = vadd.f32 %v959, %v973
        %v984 = vadd.f32 %v960, %v978
        %v985 = vadd.f32 %v961, %v979
        %986 = vset.pattern.permute.xlu0 6
        %987 = vperm.xlu0 %986, %v839
        %v988 = vpop.permute.xlu0 %987
        %v990 = vmul.f32 %v804, %v988
        %v991 = vmul.f32 %v805, %v988
        %v992 = vmul.f32 %v806, %v988
        %996 = vrot.lane.b32.xlu0 %v990, 34
        %v997 = vpop.permute.xlu0 %996
        %998 = vrot.lane.b32.xlu0 %v991, 34
        %v999 = vpop.permute.xlu0 %998
        %1000 = vrot.lane.b32.xlu0 %v992, 34
        %v1001 = vpop.permute.xlu0 %1000
        %v1002 = vsel %vm857, %v997, %v999
        %v1003 = vsel %vm857, %v999, %v1001
        %v1007 = vadd.f32 %v983, %v997
        %v1008 = vadd.f32 %v984, %v1002
        %v1009 = vadd.f32 %v985, %v1003
        %1010 = vset.pattern.permute.xlu0 7
        %1011 = vperm.xlu0 %1010, %v839
        %v1012 = vpop.permute.xlu0 %1011
        %v1014 = vmul.f32 %v822, %v1012
        %v1015 = vmul.f32 %v823, %v1012
        %v1016 = vmul.f32 %v824, %v1012
        %1020 = vrot.lane.b32.xlu0 %v1014, 34
        %v1021 = vpop.permute.xlu0 %1020
        %1022 = vrot.lane.b32.xlu0 %v1015, 34
        %v1023 = vpop.permute.xlu0 %1022
        %1024 = vrot.lane.b32.xlu0 %v1016, 34
        %v1025 = vpop.permute.xlu0 %1024
        %v1026 = vsel %vm857, %v1021, %v1023
        %v1027 = vsel %vm857, %v1023, %v1025
        %v1031 = vadd.f32 %v1007, %v1021
        %v1032 = vadd.f32 %v1008, %v1026
        %v1033 = vadd.f32 %v1009, %v1027
        %v1034 = vadd.f32 %v1031, %v324
        %v1035 = vadd.f32 %v1032, %v324
        %v1036 = vadd.f32 %v1033, %v324
        %1040 = vrot.lane.b32.xlu0 %v1034, 94
        %v1041 = vpop.permute.xlu0 %1040
        %1042 = vrot.lane.b32.xlu0 %v1035, 94
        %v1043 = vpop.permute.xlu0 %1042
        %1044 = vrot.lane.b32.xlu0 %v1036, 94
        %v1045 = vpop.permute.xlu0 %1044
        %vm1046 = vcmask 769024
        %v1047 = vsel %vm1046, %v1041, %v1043
        %v1048 = vsel %vm1046, %v1043, %v1045
        %1052 = vst [vmem:[%s163 + $0x30] sm:$0xff] %v1047
        %1053 = vst [vmem:[%s163 + $0x38] sm:$0xff] %v1048
        %1054 = vst.msk [vmem:[%s163 + $0x40] sm:$0xff] %vm331, %v1045
        %v1055 = vld [vmem:[%s168] ss:$8 sm:$0x7]
        %v1056 = vld [vmem:[%s0] sm:$0xff]
        %v1058 = vperm.slane %v1055, 0
        %v1059 = vperm.slane %v1055, 1
        %v1060 = vperm.slane %v1055, 2
        %1065 = vset.pattern.permute.xlu0 0
        %1066 = vperm.xlu0 %1065, %v1056
        %v1067 = vpop.permute.xlu0 %1066
        %v1069 = vmul.f32 %v1058, %v1067
        %v1070 = vmul.f32 %v1059, %v1067
        %v1071 = vmul.f32 %v1060, %v1067
        %v1072 = vld [vmem:[%s188] ss:$8 sm:$0x7]
        %v1074 = vperm.slane %v1072, 0
        %v1075 = vperm.slane %v1072, 1
        %v1076 = vperm.slane %v1072, 2
        %1080 = vset.pattern.permute.xlu0 1
        %1081 = vperm.xlu0 %1080, %v1056
        %v1082 = vpop.permute.xlu0 %1081
        %v1084 = vmul.f32 %v1074, %v1082
        %v1085 = vmul.f32 %v1075, %v1082
        %v1086 = vmul.f32 %v1076, %v1082
        %v1087 = vadd.f32 %v1069, %v1084
        %v1088 = vadd.f32 %v1070, %v1085
        %v1089 = vadd.f32 %v1071, %v1086
        %v1090 = vld [vmem:[%s207] ss:$8 sm:$0x7]
        %v1092 = vperm.slane %v1090, 0
        %v1093 = vperm.slane %v1090, 1
        %v1094 = vperm.slane %v1090, 2
        %1098 = vset.pattern.permute.xlu0 2
        %1099 = vperm.xlu0 %1098, %v1056
        %v1100 = vpop.permute.xlu0 %1099
        %v1102 = vmul.f32 %v1092, %v1100
        %v1103 = vmul.f32 %v1093, %v1100
        %v1104 = vmul.f32 %v1094, %v1100
        %v1105 = vadd.f32 %v1087, %v1102
        %v1106 = vadd.f32 %v1088, %v1103
        %v1107 = vadd.f32 %v1089, %v1104
        %v1108 = vld [vmem:[%s226] ss:$8 sm:$0x7]
        %v1110 = vperm.slane %v1108, 0
        %v1111 = vperm.slane %v1108, 1
        %v1112 = vperm.slane %v1108, 2
        %1116 = vset.pattern.permute.xlu0 3
        %1117 = vperm.xlu0 %1116, %v1056
        %v1118 = vpop.permute.xlu0 %1117
        %v1120 = vmul.f32 %v1110, %v1118
        %v1121 = vmul.f32 %v1111, %v1118
        %v1122 = vmul.f32 %v1112, %v1118
        %v1123 = vadd.f32 %v1105, %v1120
        %v1124 = vadd.f32 %v1106, %v1121
        %v1125 = vadd.f32 %v1107, %v1122
        %v1126 = vld [vmem:[%s245] ss:$8 sm:$0x7]
        %v1128 = vperm.slane %v1126, 0
        %v1129 = vperm.slane %v1126, 1
        %v1130 = vperm.slane %v1126, 2
        %1134 = vset.pattern.permute.xlu0 4
        %1135 = vperm.xlu0 %1134, %v1056
        %v1136 = vpop.permute.xlu0 %1135
        %v1138 = vmul.f32 %v1128, %v1136
        %v1139 = vmul.f32 %v1129, %v1136
        %v1140 = vmul.f32 %v1130, %v1136
        %v1141 = vadd.f32 %v1123, %v1138
        %v1142 = vadd.f32 %v1124, %v1139
        %v1143 = vadd.f32 %v1125, %v1140
        %v1144 = vld [vmem:[%s264] ss:$8 sm:$0x7]
        %v1146 = vperm.slane %v1144, 0
        %v1147 = vperm.slane %v1144, 1
        %v1148 = vperm.slane %v1144, 2
        %1152 = vset.pattern.permute.xlu0 5
        %1153 = vperm.xlu0 %1152, %v1056
        %v1154 = vpop.permute.xlu0 %1153
        %v1156 = vmul.f32 %v1146, %v1154
        %v1157 = vmul.f32 %v1147, %v1154
        %v1158 = vmul.f32 %v1148, %v1154
        %v1159 = vadd.f32 %v1141, %v1156
        %v1160 = vadd.f32 %v1142, %v1157
        %v1161 = vadd.f32 %v1143, %v1158
        %v1162 = vld [vmem:[%s283] ss:$8 sm:$0x7]
        %v1164 = vperm.slane %v1162, 0
        %v1165 = vperm.slane %v1162, 1
        %v1166 = vperm.slane %v1162, 2
        %1170 = vset.pattern.permute.xlu0 6
        %1171 = vperm.xlu0 %1170, %v1056
        %v1172 = vpop.permute.xlu0 %1171
        %v1174 = vmul.f32 %v1164, %v1172
        %v1175 = vmul.f32 %v1165, %v1172
        %v1176 = vmul.f32 %v1166, %v1172
        %v1177 = vadd.f32 %v1159, %v1174
        %v1178 = vadd.f32 %v1160, %v1175
        %v1179 = vadd.f32 %v1161, %v1176
        %v1180 = vld [vmem:[%s302] ss:$8 sm:$0x7]
        %v1182 = vperm.slane %v1180, 0
        %v1183 = vperm.slane %v1180, 1
        %v1184 = vperm.slane %v1180, 2
        %1188 = vset.pattern.permute.xlu0 7
        %1189 = vperm.xlu0 %1188, %v1056
        %v1190 = vpop.permute.xlu0 %1189
        %v1192 = vmul.f32 %v1182, %v1190
        %v1193 = vmul.f32 %v1183, %v1190
        %v1194 = vmul.f32 %v1184, %v1190
        %v1195 = vadd.f32 %v1177, %v1192
        %v1196 = vadd.f32 %v1178, %v1193
        %v1197 = vadd.f32 %v1179, %v1194
        %s1198 = scalar_lea.vmem %s0, 16
        %v1199 = vld [vmem:[%s1198] sm:$0xff]
        %1201 = vset.pattern.permute.xlu0 0
        %1202 = vperm.xlu0 %1201, %v1199
        %v1203 = vpop.permute.xlu0 %1202
        %v1205 = vmul.f32 %v1058, %v1203
        %v1206 = vmul.f32 %v1059, %v1203
        %v1207 = vmul.f32 %v1060, %v1203
        %1211 = vrot.lane.b32.xlu0 %v1205, 1
        %v1212 = vpop.permute.xlu0 %1211
        %1213 = vrot.lane.b32.xlu0 %v1206, 1
        %v1214 = vpop.permute.xlu0 %1213
        %1215 = vrot.lane.b32.xlu0 %v1207, 1
        %v1216 = vpop.permute.xlu0 %1215
        %v1217 = vsel %vm496, %v1212, %v1214
        %v1218 = vsel %vm496, %v1214, %v1216
        %v1222 = vadd.f32 %v1195, %v1212
        %v1223 = vadd.f32 %v1196, %v1217
        %v1224 = vadd.f32 %v1197, %v1218
        %1225 = vset.pattern.permute.xlu0 1
        %1226 = vperm.xlu0 %1225, %v1199
        %v1227 = vpop.permute.xlu0 %1226
        %v1229 = vmul.f32 %v1074, %v1227
        %v1230 = vmul.f32 %v1075, %v1227
        %v1231 = vmul.f32 %v1076, %v1227
        %1235 = vrot.lane.b32.xlu0 %v1229, 1
        %v1236 = vpop.permute.xlu0 %1235
        %1237 = vrot.lane.b32.xlu0 %v1230, 1
        %v1238 = vpop.permute.xlu0 %1237
        %1239 = vrot.lane.b32.xlu0 %v1231, 1
        %v1240 = vpop.permute.xlu0 %1239
        %v1241 = vsel %vm496, %v1236, %v1238
        %v1242 = vsel %vm496, %v1238, %v1240
        %v1246 = vadd.f32 %v1222, %v1236
        %v1247 = vadd.f32 %v1223, %v1241
        %v1248 = vadd.f32 %v1224, %v1242
        %1249 = vset.pattern.permute.xlu0 2
        %1250 = vperm.xlu0 %1249, %v1199
        %v1251 = vpop.permute.xlu0 %1250
        %v1253 = vmul.f32 %v1092, %v1251
        %v1254 = vmul.f32 %v1093, %v1251
        %v1255 = vmul.f32 %v1094, %v1251
        %1259 = vrot.lane.b32.xlu0 %v1253, 1
        %v1260 = vpop.permute.xlu0 %1259
        %1261 = vrot.lane.b32.xlu0 %v1254, 1
        %v1262 = vpop.permute.xlu0 %1261
        %1263 = vrot.lane.b32.xlu0 %v1255, 1
        %v1264 = vpop.permute.xlu0 %1263
        %v1265 = vsel %vm496, %v1260, %v1262
        %v1266 = vsel %vm496, %v1262, %v1264
        %v1270 = vadd.f32 %v1246, %v1260
        %v1271 = vadd.f32 %v1247, %v1265
        %v1272 = vadd.f32 %v1248, %v1266
        %1273 = vset.pattern.permute.xlu0 3
        %1274 = vperm.xlu0 %1273, %v1199
        %v1275 = vpop.permute.xlu0 %1274
        %v1277 = vmul.f32 %v1110, %v1275
        %v1278 = vmul.f32 %v1111, %v1275
        %v1279 = vmul.f32 %v1112, %v1275
        %1283 = vrot.lane.b32.xlu0 %v1277, 1
        %v1284 = vpop.permute.xlu0 %1283
        %1285 = vrot.lane.b32.xlu0 %v1278, 1
        %v1286 = vpop.permute.xlu0 %1285
        %1287 = vrot.lane.b32.xlu0 %v1279, 1
        %v1288 = vpop.permute.xlu0 %1287
        %v1289 = vsel %vm496, %v1284, %v1286
        %v1290 = vsel %vm496, %v1286, %v1288
        %v1294 = vadd.f32 %v1270, %v1284
        %v1295 = vadd.f32 %v1271, %v1289
        %v1296 = vadd.f32 %v1272, %v1290
        %1297 = vset.pattern.permute.xlu0 4
        %1298 = vperm.xlu0 %1297, %v1199
        %v1299 = vpop.permute.xlu0 %1298
        %v1301 = vmul.f32 %v1128, %v1299
        %v1302 = vmul.f32 %v1129, %v1299
        %v1303 = vmul.f32 %v1130, %v1299
        %1307 = vrot.lane.b32.xlu0 %v1301, 1
        %v1308 = vpop.permute.xlu0 %1307
        %1309 = vrot.lane.b32.xlu0 %v1302, 1
        %v1310 = vpop.permute.xlu0 %1309
        %1311 = vrot.lane.b32.xlu0 %v1303, 1
        %v1312 = vpop.permute.xlu0 %1311
        %v1313 = vsel %vm496, %v1308, %v1310
        %v1314 = vsel %vm496, %v1310, %v1312
        %v1318 = vadd.f32 %v1294, %v1308
        %v1319 = vadd.f32 %v1295, %v1313
        %v1320 = vadd.f32 %v1296, %v1314
        %1321 = vset.pattern.permute.xlu0 5
        %1322 = vperm.xlu0 %1321, %v1199
        %v1323 = vpop.permute.xlu0 %1322
        %v1325 = vmul.f32 %v1146, %v1323
        %v1326 = vmul.f32 %v1147, %v1323
        %v1327 = vmul.f32 %v1148, %v1323
        %1331 = vrot.lane.b32.xlu0 %v1325, 1
        %v1332 = vpop.permute.xlu0 %1331
        %1333 = vrot.lane.b32.xlu0 %v1326, 1
        %v1334 = vpop.permute.xlu0 %1333
        %1335 = vrot.lane.b32.xlu0 %v1327, 1
        %v1336 = vpop.permute.xlu0 %1335
        %v1337 = vsel %vm496, %v1332, %v1334
        %v1338 = vsel %vm496, %v1334, %v1336
        %v1342 = vadd.f32 %v1318, %v1332
        %v1343 = vadd.f32 %v1319, %v1337
        %v1344 = vadd.f32 %v1320, %v1338
        %1345 = vset.pattern.permute.xlu0 6
        %1346 = vperm.xlu0 %1345, %v1199
        %v1347 = vpop.permute.xlu0 %1346
        %v1349 = vmul.f32 %v1164, %v1347
        %v1350 = vmul.f32 %v1165, %v1347
        %v1351 = vmul.f32 %v1166, %v1347
        %1355 = vrot.lane.b32.xlu0 %v1349, 1
        %v1356 = vpop.permute.xlu0 %1355
        %1357 = vrot.lane.b32.xlu0 %v1350, 1
        %v1358 = vpop.permute.xlu0 %1357
        %1359 = vrot.lane.b32.xlu0 %v1351, 1
        %v1360 = vpop.permute.xlu0 %1359
        %v1361 = vsel %vm496, %v1356, %v1358
        %v1362 = vsel %vm496, %v1358, %v1360
        %v1366 = vadd.f32 %v1342, %v1356
        %v1367 = vadd.f32 %v1343, %v1361
        %v1368 = vadd.f32 %v1344, %v1362
        %1369 = vset.pattern.permute.xlu0 7
        %1370 = vperm.xlu0 %1369, %v1199
        %v1371 = vpop.permute.xlu0 %1370
        %v1373 = vmul.f32 %v1182, %v1371
        %v1374 = vmul.f32 %v1183, %v1371
        %v1375 = vmul.f32 %v1184, %v1371
        %1379 = vrot.lane.b32.xlu0 %v1373, 1
        %v1380 = vpop.permute.xlu0 %1379
        %1381 = vrot.lane.b32.xlu0 %v1374, 1
        %v1382 = vpop.permute.xlu0 %1381
        %1383 = vrot.lane.b32.xlu0 %v1375, 1
        %v1384 = vpop.permute.xlu0 %1383
        %v1385 = vsel %vm496, %v1380, %v1382
        %v1386 = vsel %vm496, %v1382, %v1384
        %v1390 = vadd.f32 %v1366, %v1380
        %v1391 = vadd.f32 %v1367, %v1385
        %v1392 = vadd.f32 %v1368, %v1386
        %s1393 = scalar_lea.vmem %s0, 48
        %v1394 = vld [vmem:[%s1393] sm:$0xff]
        %1396 = vset.pattern.permute.xlu0 0
        %1397 = vperm.xlu0 %1396, %v1394
        %v1398 = vpop.permute.xlu0 %1397
        %v1400 = vmul.f32 %v1058, %v1398
        %v1401 = vmul.f32 %v1059, %v1398
        %v1402 = vmul.f32 %v1060, %v1398
        %1406 = vrot.lane.b32.xlu0 %v1400, 34
        %v1407 = vpop.permute.xlu0 %1406
        %1408 = vrot.lane.b32.xlu0 %v1401, 34
        %v1409 = vpop.permute.xlu0 %1408
        %1410 = vrot.lane.b32.xlu0 %v1402, 34
        %v1411 = vpop.permute.xlu0 %1410
        %v1412 = vsel %vm857, %v1407, %v1409
        %v1413 = vsel %vm857, %v1409, %v1411
        %v1417 = vadd.f32 %v1390, %v1407
        %v1418 = vadd.f32 %v1391, %v1412
        %v1419 = vadd.f32 %v1392, %v1413
        %1420 = vset.pattern.permute.xlu0 1
        %1421 = vperm.xlu0 %1420, %v1394
        %v1422 = vpop.permute.xlu0 %1421
        %v1424 = vmul.f32 %v1074, %v1422
        %v1425 = vmul.f32 %v1075, %v1422
        %v1426 = vmul.f32 %v1076, %v1422
        %1430 = vrot.lane.b32.xlu0 %v1424, 34
        %v1431 = vpop.permute.xlu0 %1430
        %1432 = vrot.lane.b32.xlu0 %v1425, 34
        %v1433 = vpop.permute.xlu0 %1432
        %1434 = vrot.lane.b32.xlu0 %v1426, 34
        %v1435 = vpop.permute.xlu0 %1434
        %v1436 = vsel %vm857, %v1431, %v1433
        %v1437 = vsel %vm857, %v1433, %v1435
        %v1441 = vadd.f32 %v1417, %v1431
        %v1442 = vadd.f32 %v1418, %v1436
        %v1443 = vadd.f32 %v1419, %v1437
        %1444 = vset.pattern.permute.xlu0 2
        %1445 = vperm.xlu0 %1444, %v1394
        %v1446 = vpop.permute.xlu0 %1445
        %v1448 = vmul.f32 %v1092, %v1446
        %v1449 = vmul.f32 %v1093, %v1446
        %v1450 = vmul.f32 %v1094, %v1446
        %1454 = vrot.lane.b32.xlu0 %v1448, 34
        %v1455 = vpop.permute.xlu0 %1454
        %1456 = vrot.lane.b32.xlu0 %v1449, 34
        %v1457 = vpop.permute.xlu0 %1456
        %1458 = vrot.lane.b32.xlu0 %v1450, 34
        %v1459 = vpop.permute.xlu0 %1458
        %v1460 = vsel %vm857, %v1455, %v1457
        %v1461 = vsel %vm857, %v1457, %v1459
        %v1465 = vadd.f32 %v1441, %v1455
        %v1466 = vadd.f32 %v1442, %v1460
        %v1467 = vadd.f32 %v1443, %v1461
        %1468 = vset.pattern.permute.xlu0 3
        %1469 = vperm.xlu0 %1468, %v1394
        %v1470 = vpop.permute.xlu0 %1469
        %v1472 = vmul.f32 %v1110, %v1470
        %v1473 = vmul.f32 %v1111, %v1470
        %v1474 = vmul.f32 %v1112, %v1470
        %1478 = vrot.lane.b32.xlu0 %v1472, 34
        %v1479 = vpop.permute.xlu0 %1478
        %1480 = vrot.lane.b32.xlu0 %v1473, 34
        %v1481 = vpop.permute.xlu0 %1480
        %1482 = vrot.lane.b32.xlu0 %v1474, 34
        %v1483 = vpop.permute.xlu0 %1482
        %v1484 = vsel %vm857, %v1479, %v1481
        %v1485 = vsel %vm857, %v1481, %v1483
        %v1489 = vadd.f32 %v1465, %v1479
        %v1490 = vadd.f32 %v1466, %v1484
        %v1491 = vadd.f32 %v1467, %v1485
        %1492 = vset.pattern.permute.xlu0 4
        %1493 = vperm.xlu0 %1492, %v1394
        %v1494 = vpop.permute.xlu0 %1493
        %v1496 = vmul.f32 %v1128, %v1494
        %v1497 = vmul.f32 %v1129, %v1494
        %v1498 = vmul.f32 %v1130, %v1494
        %1502 = vrot.lane.b32.xlu0 %v1496, 34
        %v1503 = vpop.permute.xlu0 %1502
        %1504 = vrot.lane.b32.xlu0 %v1497, 34
        %v1505 = vpop.permute.xlu0 %1504
        %1506 = vrot.lane.b32.xlu0 %v1498, 34
        %v1507 = vpop.permute.xlu0 %1506
        %v1508 = vsel %vm857, %v1503, %v1505
        %v1509 = vsel %vm857, %v1505, %v1507
        %v1513 = vadd.f32 %v1489, %v1503
        %v1514 = vadd.f32 %v1490, %v1508
        %v1515 = vadd.f32 %v1491, %v1509
        %1516 = vset.pattern.permute.xlu0 5
        %1517 = vperm.xlu0 %1516, %v1394
        %v1518 = vpop.permute.xlu0 %1517
        %v1520 = vmul.f32 %v1146, %v1518
        %v1521 = vmul.f32 %v1147, %v1518
        %v1522 = vmul.f32 %v1148, %v1518
        %1526 = vrot.lane.b32.xlu0 %v1520, 34
        %v1527 = vpop.permute.xlu0 %1526
        %1528 = vrot.lane.b32.xlu0 %v1521, 34
        %v1529 = vpop.permute.xlu0 %1528
        %1530 = vrot.lane.b32.xlu0 %v1522, 34
        %v1531 = vpop.permute.xlu0 %1530
        %v1532 = vsel %vm857, %v1527, %v1529
        %v1533 = vsel %vm857, %v1529, %v1531
        %v1537 = vadd.f32 %v1513, %v1527
        %v1538 = vadd.f32 %v1514, %v1532
        %v1539 = vadd.f32 %v1515, %v1533
        %1540 = vset.pattern.permute.xlu0 6
        %1541 = vperm.xlu0 %1540, %v1394
        %v1542 = vpop.permute.xlu0 %1541
        %v1544 = vmul.f32 %v1164, %v1542
        %v1545 = vmul.f32 %v1165, %v1542
        %v1546 = vmul.f32 %v1166, %v1542
        %1550 = vrot.lane.b32.xlu0 %v1544, 34
        %v1551 = vpop.permute.xlu0 %1550
        %1552 = vrot.lane.b32.xlu0 %v1545, 34
        %v1553 = vpop.permute.xlu0 %1552
        %1554 = vrot.lane.b32.xlu0 %v1546, 34
        %v1555 = vpop.permute.xlu0 %1554
        %v1556 = vsel %vm857, %v1551, %v1553
        %v1557 = vsel %vm857, %v1553, %v1555
        %v1561 = vadd.f32 %v1537, %v1551
        %v1562 = vadd.f32 %v1538, %v1556
        %v1563 = vadd.f32 %v1539, %v1557
        %1564 = vset.pattern.permute.xlu0 7
        %1565 = vperm.xlu0 %1564, %v1394
        %v1566 = vpop.permute.xlu0 %1565
        %v1568 = vmul.f32 %v1182, %v1566
        %v1569 = vmul.f32 %v1183, %v1566
        %v1570 = vmul.f32 %v1184, %v1566
        %1574 = vrot.lane.b32.xlu0 %v1568, 34
        %v1575 = vpop.permute.xlu0 %1574
        %1576 = vrot.lane.b32.xlu0 %v1569, 34
        %v1577 = vpop.permute.xlu0 %1576
        %1578 = vrot.lane.b32.xlu0 %v1570, 34
        %v1579 = vpop.permute.xlu0 %1578
        %v1580 = vsel %vm857, %v1575, %v1577
        %v1581 = vsel %vm857, %v1577, %v1579
        %v1585 = vadd.f32 %v1561, %v1575
        %v1586 = vadd.f32 %v1562, %v1580
        %v1587 = vadd.f32 %v1563, %v1581
        %s1588 = scalar_lea.vmem %s0, 64
        %v1589 = vld [vmem:[%s1588] sm:$0xff]
        %1591 = vset.pattern.permute.xlu0 0
        %1592 = vperm.xlu0 %1591, %v1589
        %v1593 = vpop.permute.xlu0 %1592
        %v1595 = vmul.f32 %v1058, %v1593
        %v1596 = vmul.f32 %v1059, %v1593
        %v1597 = vmul.f32 %v1060, %v1593
        %1601 = vrot.lane.b32.xlu0 %v1595, 35
        %v1602 = vpop.permute.xlu0 %1601
        %1603 = vrot.lane.b32.xlu0 %v1596, 35
        %v1604 = vpop.permute.xlu0 %1603
        %1605 = vrot.lane.b32.xlu0 %v1597, 35
        %v1606 = vpop.permute.xlu0 %1605
        %vm1607 = vcmask 285696
        %v1608 = vsel %vm1607, %v1602, %v1604
        %v1609 = vsel %vm1607, %v1604, %v1606
        %v1613 = vadd.f32 %v1585, %v1602
        %v1614 = vadd.f32 %v1586, %v1608
        %v1615 = vadd.f32 %v1587, %v1609
        %1616 = vset.pattern.permute.xlu0 1
        %1617 = vperm.xlu0 %1616, %v1589
        %v1618 = vpop.permute.xlu0 %1617
        %v1620 = vmul.f32 %v1074, %v1618
        %v1621 = vmul.f32 %v1075, %v1618
        %v1622 = vmul.f32 %v1076, %v1618
        %1626 = vrot.lane.b32.xlu0 %v1620, 35
        %v1627 = vpop.permute.xlu0 %1626
        %1628 = vrot.lane.b32.xlu0 %v1621, 35
        %v1629 = vpop.permute.xlu0 %1628
        %1630 = vrot.lane.b32.xlu0 %v1622, 35
        %v1631 = vpop.permute.xlu0 %1630
        %v1632 = vsel %vm1607, %v1627, %v1629
        %v1633 = vsel %vm1607, %v1629, %v1631
        %v1637 = vadd.f32 %v1613, %v1627
        %v1638 = vadd.f32 %v1614, %v1632
        %v1639 = vadd.f32 %v1615, %v1633
        %1640 = vset.pattern.permute.xlu0 2
        %1641 = vperm.xlu0 %1640, %v1589
        %v1642 = vpop.permute.xlu0 %1641
        %v1644 = vmul.f32 %v1092, %v1642
        %v1645 = vmul.f32 %v1093, %v1642
        %v1646 = vmul.f32 %v1094, %v1642
        %1650 = vrot.lane.b32.xlu0 %v1644, 35
        %v1651 = vpop.permute.xlu0 %1650
        %1652 = vrot.lane.b32.xlu0 %v1645, 35
        %v1653 = vpop.permute.xlu0 %1652
        %1654 = vrot.lane.b32.xlu0 %v1646, 35
        %v1655 = vpop.permute.xlu0 %1654
        %v1656 = vsel %vm1607, %v1651, %v1653
        %v1657 = vsel %vm1607, %v1653, %v1655
        %v1661 = vadd.f32 %v1637, %v1651
        %v1662 = vadd.f32 %v1638, %v1656
        %v1663 = vadd.f32 %v1639, %v1657
        %1664 = vset.pattern.permute.xlu0 3
        %1665 = vperm.xlu0 %1664, %v1589
        %v1666 = vpop.permute.xlu0 %1665
        %v1668 = vmul.f32 %v1110, %v1666
        %v1669 = vmul.f32 %v1111, %v1666
        %v1670 = vmul.f32 %v1112, %v1666
        %1674 = vrot.lane.b32.xlu0 %v1668, 35
        %v1675 = vpop.permute.xlu0 %1674
        %1676 = vrot.lane.b32.xlu0 %v1669, 35
        %v1677 = vpop.permute.xlu0 %1676
        %1678 = vrot.lane.b32.xlu0 %v1670, 35
        %v1679 = vpop.permute.xlu0 %1678
        %v1680 = vsel %vm1607, %v1675, %v1677
        %v1681 = vsel %vm1607, %v1677, %v1679
        %v1685 = vadd.f32 %v1661, %v1675
        %v1686 = vadd.f32 %v1662, %v1680
        %v1687 = vadd.f32 %v1663, %v1681
        %1688 = vset.pattern.permute.xlu0 4
        %1689 = vperm.xlu0 %1688, %v1589
        %v1690 = vpop.permute.xlu0 %1689
        %v1692 = vmul.f32 %v1128, %v1690
        %v1693 = vmul.f32 %v1129, %v1690
        %v1694 = vmul.f32 %v1130, %v1690
        %1698 = vrot.lane.b32.xlu0 %v1692, 35
        %v1699 = vpop.permute.xlu0 %1698
        %1700 = vrot.lane.b32.xlu0 %v1693, 35
        %v1701 = vpop.permute.xlu0 %1700
        %1702 = vrot.lane.b32.xlu0 %v1694, 35
        %v1703 = vpop.permute.xlu0 %1702
        %v1704 = vsel %vm1607, %v1699, %v1701
        %v1705 = vsel %vm1607, %v1701, %v1703
        %v1709 = vadd.f32 %v1685, %v1699
        %v1710 = vadd.f32 %v1686, %v1704
        %v1711 = vadd.f32 %v1687, %v1705
        %1712 = vset.pattern.permute.xlu0 5
        %1713 = vperm.xlu0 %1712, %v1589
        %v1714 = vpop.permute.xlu0 %1713
        %v1716 = vmul.f32 %v1146, %v1714
        %v1717 = vmul.f32 %v1147, %v1714
        %v1718 = vmul.f32 %v1148, %v1714
        %1722 = vrot.lane.b32.xlu0 %v1716, 35
        %v1723 = vpop.permute.xlu0 %1722
        %1724 = vrot.lane.b32.xlu0 %v1717, 35
        %v1725 = vpop.permute.xlu0 %1724
        %1726 = vrot.lane.b32.xlu0 %v1718, 35
        %v1727 = vpop.permute.xlu0 %1726
        %v1728 = vsel %vm1607, %v1723, %v1725
        %v1729 = vsel %vm1607, %v1725, %v1727
        %v1733 = vadd.f32 %v1709, %v1723
        %v1734 = vadd.f32 %v1710, %v1728
        %v1735 = vadd.f32 %v1711, %v1729
        %1736 = vset.pattern.permute.xlu0 6
        %1737 = vperm.xlu0 %1736, %v1589
        %v1738 = vpop.permute.xlu0 %1737
        %v1740 = vmul.f32 %v1164, %v1738
        %v1741 = vmul.f32 %v1165, %v1738
        %v1742 = vmul.f32 %v1166, %v1738
        %1746 = vrot.lane.b32.xlu0 %v1740, 35
        %v1747 = vpop.permute.xlu0 %1746
        %1748 = vrot.lane.b32.xlu0 %v1741, 35
        %v1749 = vpop.permute.xlu0 %1748
        %1750 = vrot.lane.b32.xlu0 %v1742, 35
        %v1751 = vpop.permute.xlu0 %1750
        %v1752 = vsel %vm1607, %v1747, %v1749
        %v1753 = vsel %vm1607, %v1749, %v1751
        %v1757 = vadd.f32 %v1733, %v1747
        %v1758 = vadd.f32 %v1734, %v1752
        %v1759 = vadd.f32 %v1735, %v1753
        %1760 = vset.pattern.permute.xlu0 7
        %1761 = vperm.xlu0 %1760, %v1589
        %v1762 = vpop.permute.xlu0 %1761
        %v1764 = vmul.f32 %v1182, %v1762
        %v1765 = vmul.f32 %v1183, %v1762
        %v1766 = vmul.f32 %v1184, %v1762
        %1770 = vrot.lane.b32.xlu0 %v1764, 35
        %v1771 = vpop.permute.xlu0 %1770
        %1772 = vrot.lane.b32.xlu0 %v1765, 35
        %v1773 = vpop.permute.xlu0 %1772
        %1774 = vrot.lane.b32.xlu0 %v1766, 35
        %v1775 = vpop.permute.xlu0 %1774
        %v1776 = vsel %vm1607, %v1771, %v1773
        %v1777 = vsel %vm1607, %v1773, %v1775
        %v1781 = vadd.f32 %v1757, %v1771
        %v1782 = vadd.f32 %v1758, %v1776
        %v1783 = vadd.f32 %v1759, %v1777
        %v1784 = vadd.f32 %v1781, %v324
        %v1785 = vadd.f32 %v1782, %v324
        %v1786 = vadd.f32 %v1783, %v324
        %1790 = vrot.lane.b32.xlu0 %v1784, 93
        %v1791 = vpop.permute.xlu0 %1790
        %1792 = vrot.lane.b32.xlu0 %v1785, 93
        %v1793 = vpop.permute.xlu0 %1792
        %1794 = vrot.lane.b32.xlu0 %v1786, 93
        %v1795 = vpop.permute.xlu0 %1794
        %vm1796 = vcmask 760832
        %v1797 = vsel %vm1796, %v1791, %v1793
        %v1798 = vsel %vm1796, %v1793, %v1795
        %1802 = vst [vmem:[%s163 + $0x48] sm:$0xff] %v1797
        %1803 = vst [vmem:[%s163 + $0x50] sm:$0xff] %v1798
        %1804 = vst.msk [vmem:[%s163 + $0x58] sm:$0xff] %vm331, %v1795
        %s1805 = sand.u32 %s93, 1
        %s1806 = scalar_lea.sflag [#allocation3], %s1805
        %s1807 = sand.u32 %s93, 1
        %s1808 = smul.addr %s1807, 96
        %s1809 = scalar_lea.vmem [#allocation2], %s1808
        // Predicated region
        $region33: #{tpu_custom_call.1} parent=31 // pred_check
          %p1810 = pneg %p103
        $region34: #{tpu_custom_call.1} parent=31 // pred_check_branch
          %1812 = sbr.rel (%p1810) target = $region36
        $region35: #{tpu_custom_call.1} parent=31 // pred_region
          %1814 = vsyncadd %s1806, 0
          %s1815 = smul.addr %s17, 12
          %s1816 = smul.addr %s1815, 8
          %s1817 = scalar_lea.hbm %s3, %s1816
          %s1818 = sshll.u32 %s1809, 4
          %s1819 = int_to_ptr.vmem [resolvable:$true] %s1818
          %s1820 = sshll.u32 %s1817, 4
          %s1821 = int_to_ptr.hbm [resolvable:$true] %s1820
          %1826 = dma.vmem_to_hbm [thread:$0]  %s1819, 1536, %s1821, %s1806, 384, 384, 24
        $region36: #{tpu_custom_call.1} parent=31 // pred_fallthru
          _
      $region32: #{tpu_custom_call.1} parent=5 // pred_fallthru
        _
      %p1827 = scmp.le.s32.totalorder 2, %s12
      // Predicated region
      $region37: #{tpu_custom_call.1} parent=5 // pred_check
        %p1828 = pneg %p1827
      $region38: #{tpu_custom_call.1} parent=5 // pred_check_branch
        %1830 = sbr.rel (%p1828) target = $region40
      $region39: #{tpu_custom_call.1} parent=5 // pred_region
        %s1831 = ssub.s32 %s12, 2
        // Predicated region
        $region41: #{tpu_custom_call.1} parent=39 // pred_check
          %p1832 = pneg %p109
        $region42: #{tpu_custom_call.1} parent=39 // pred_check_branch
          %1834 = sbr.rel (%p1832) target = $region44
        $region43: #{tpu_custom_call.1} parent=39 // pred_region
          %s1835 = sand.u32 %s94, 1
          %s1836 = scalar_lea.sflag [#allocation3], %s1835
          %s1837 = sand.u32 %s94, 1
          %s1838 = smul.addr %s1837, 96
          %s1839 = scalar_lea.vmem [#allocation2], %s1838
          %1841 = dma.done %s1836, 1536
        $region44: #{tpu_custom_call.1} parent=39 // pred_fallthru
          _
      $region40: #{tpu_custom_call.1} parent=5 // pred_fallthru
        _
    $region6: #{tpu_custom_call.1} parent=1 // loop_footer
      %s16 = sadd.s32 1, %s12
    $region7: #{tpu_custom_call.1} parent=1 // loop_footer_branch
      %11 = sbr.rel target = $region3
    $region8: #{tpu_custom_call.1} parent=1 // loop_exit
      _
    %1842 = vsyncpa [#allocation3], 1
    %s1843 = scalar_lea.sflag [#allocation3], 1
    %1844 = vsyncpa %s1843, 1

</llo_original>
